<compile_context>
chip_gen: v5e
topology: v5e:2x2
jax: 0.10.0
libtpu: 0.0.40
codegen_flags: <defaults>
</compile_context>

<pallas_src>
import functools
import numpy as np
import jax
import jax.numpy as jnp
from jax.experimental import pallas as pl
from jax.experimental.pallas import tpu as pltpu


def _round_up(x, m):
    return (x + m - 1) // m * m


def _cdiv(a, b):
    return -(-a // b)


# ---------------------------------------------------------------------------
# Pallas kernel: embed (one-hot gather) + Conv1d + max-over-time + ReLU + FC
# for one batch tile.
# ---------------------------------------------------------------------------
def cnn_head_kernel(ids_ref, table_ref, wk_ref, cb_ref, fw_ref, fb_ref, out_ref):
    # ids_ref   : (TB, L)            int32  token ids for this batch tile
    # table_ref : (V_pad, E_pad)     bf16   zero-padded embedding table
    # wk_ref    : (K, E_pad, F_pad)  bf16   per-tap conv weights (e, f) per k
    # cb_ref    : (1, F_pad)         f32    conv bias (zero padded)
    # fw_ref    : (1, F_pad)         f32    fc weight row (zero padded)
    # fb_ref    : (1, 1)             f32    fc bias
    # out_ref   : (TB, 1)            f32    logits for this tile
    TB, L = ids_ref.shape
    V_pad, E_pad = table_ref.shape
    K = wk_ref.shape[0]
    F_pad = wk_ref.shape[2]
    Lout = L - K + 1

    # ---- fused embedding gather: exact one-hot selection on the MXU --------
    ids3 = ids_ref[...][:, :, None]                                  # (TB, L, 1)
    vocab_iota = jax.lax.broadcasted_iota(jnp.int32, (TB, L, V_pad), 2)
    onehot = (vocab_iota == ids3).astype(jnp.float32).astype(jnp.bfloat16)
    emb = jax.lax.dot_general(
        onehot.reshape(TB * L, V_pad), table_ref[...],
        dimension_numbers=(((1,), (0,)), ((), ())),
        preferred_element_type=jnp.float32,
    ).astype(jnp.bfloat16)                                           # (TB*L, E_pad)
    emb = emb.reshape(TB, L, E_pad)

    # ---- Conv1d (valid) as K accumulated 2-D matmuls, M = TB*Lout ----------
    acc = jnp.zeros((TB * Lout, F_pad), jnp.float32)
    for k in range(K):                                   # K is tiny -> unrolled
        xk = emb[:, k:k + Lout, :].reshape(TB * Lout, E_pad)
        acc = acc + jax.lax.dot_general(
            xk, wk_ref[k],
            dimension_numbers=(((1,), (0,)), ((), ())),
            preferred_element_type=jnp.float32)

    # ---- max over time, then bias + ReLU (exact reorder: bias const in t) --
    pooled = jnp.max(acc.reshape(TB, Lout, F_pad), axis=1)          # (TB, F_pad)
    pooled = jnp.maximum(pooled + cb_ref[...], 0.0)

    # Dropout: identity at inference.
    # TODO(synk): training-mode dropout (pltpu.prng_random_bits mask + 1/(1-p)).

    # ---- 1-wide FC on VPU (mul) + lane reduce (no lane-1 MXU matmul) -------
    out_ref[...] = (jnp.sum(pooled * fw_ref[...], axis=-1, keepdims=True)
                    + fb_ref[...])


# ---------------------------------------------------------------------------
# VMEM budgeting / tile selection (generation aware)
# ---------------------------------------------------------------------------
def _vmem_limit_bytes():
    try:
        cap = int(pltpu.get_tpu_info().vmem_capacity_bytes)
    except Exception:
        cap = 64 * 1024 * 1024          # conservative (v7x-sized) fallback
    # Leave headroom for compiler scratch / DMA descriptors / spills:
    # 96 MiB on v5e/v6e (128 MiB), 48 MiB on v7x (64 MiB).
    return max(32 * 1024 * 1024, cap * 3 // 4)


def _choose_batch_tile(B, L, K, E_pad, F_pad, V_pad, vmem_limit_bytes):
    """Batch tile: fits the VMEM budget, balanced across steps, >=2 steps when
    the batch is big enough (v7x has 2 TensorCores)."""
    Lout = L - K + 1
    per_row = (                              # conservative per-batch-row bytes
        2 * L * 4                            # double-buffered ids tile (int32)
        + L * V_pad * 6                      # iota (i32) + one-hot (bf16)
        + L * E_pad * 6                      # gathered embeddings (f32 + bf16)
        + 2 * Lout * E_pad * 2               # per-tap im2col slices (bf16)
        + Lout * F_pad * 4                   # f32 conv accumulator
        + 4 * F_pad * 4                      # pooled / fc temporaries
    )
    fixed = 2 * (V_pad * E_pad * 2 + K * E_pad * F_pad * 2 + 3 * F_pad * 4)
    budget = int(vmem_limit_bytes * 0.6) - fixed
    tb_max = max(8, min((budget // max(per_row, 1)) // 8 * 8, 1024))

    b_ceil = _round_up(max(B, 8), 8)
    if tb_max >= b_ceil:
        if b_ceil >= 16:                     # split so both v7x TCs get work
            return _round_up(_cdiv(b_ceil, 2), 8)
        return b_ceil
    n_steps = _cdiv(b_ceil, tb_max)          # balance tiles -> less pad waste
    return _round_up(_cdiv(b_ceil, n_steps), 8)


# ---------------------------------------------------------------------------
# Parameter prep (hoisted out of the forward: once per parameter set)
# ---------------------------------------------------------------------------
def prepare_params(params, onehot_vocab_max=2048):
    emb_table = jnp.asarray(params["embedding"], jnp.float32)   # (V, E)
    conv_w = jnp.asarray(params["conv_w"], jnp.float32)         # (F, E, K) torch
    conv_b = jnp.asarray(params["conv_b"], jnp.float32)         # (F,)
    fc_w = jnp.asarray(params["fc_w"], jnp.float32)             # (1, F)  torch
    fc_b = jnp.asarray(params["fc_b"], jnp.float32)             # (1,)

    V, E = emb_table.shape
    F, _, K = conv_w.shape
    E_pad = _round_up(E, 64)
    F_pad = _round_up(F, 128)
    V_pad = _round_up(V, 128)
    assert V_pad <= onehot_vocab_max, (
        "in-kernel one-hot gather is sized for small/medium vocab")
    # TODO(synk): large-vocab path — keep the table in HBM (pl.ANY) and DMA-
    # gather rows with scalar-prefetched ids instead of the one-hot matmul.

    table = jnp.pad(emb_table, ((0, V_pad - V), (0, E_pad - E))
                    ).astype(jnp.bfloat16)                          # (V_pad, E_pad)
    wk = jnp.transpose(conv_w, (2, 1, 0))                           # (K, E, F)
    wk = jnp.pad(wk, ((0, 0), (0, E_pad - E), (0, F_pad - F))
                 ).astype(jnp.bfloat16)                             # (K, E_pad, F_pad)
    cb = jnp.pad(conv_b, (0, F_pad - F)).reshape(1, F_pad)
    fw = jnp.pad(fc_w[0], (0, F_pad - F)).reshape(1, F_pad)
    fb = fc_b.reshape(1, 1)
    return dict(table=table, wk=wk, cb=cb, fw=fw, fb=fb)


# ---------------------------------------------------------------------------
# Forward
# ---------------------------------------------------------------------------
@functools.partial(jax.jit, static_argnames=("batch_tile", "vmem_limit_bytes"))
def _forward_impl(token_ids, table, wk, cb, fw, fb, *, batch_tile,
                  vmem_limit_bytes):
    B, L = token_ids.shape
    V_pad, E_pad = table.shape
    K, _, F_pad = wk.shape
    assert L >= K, "sequence shorter than conv kernel"

    tb = batch_tile
    B_pad = _round_up(B, tb)
    ids = token_ids.astype(jnp.int32)
    if B_pad != B:
        ids = jnp.pad(ids, ((0, B_pad - B), (0, 0)))     # pad rows -> id 0

    out = pl.pallas_call(
        cnn_head_kernel,
        out_shape=jax.ShapeDtypeStruct((B_pad, 1), jnp.float32),
        grid=(B_pad // tb,),
        in_specs=[
            pl.BlockSpec((tb, L), lambda i: (i, 0)),               # ids
            pl.BlockSpec((V_pad, E_pad), lambda i: (0, 0)),        # table
            pl.BlockSpec((K, E_pad, F_pad), lambda i: (0, 0, 0)),  # conv w
            pl.BlockSpec((1, F_pad), lambda i: (0, 0)),            # conv b
            pl.BlockSpec((1, F_pad), lambda i: (0, 0)),            # fc w
            pl.BlockSpec((1, 1), lambda i: (0, 0)),                # fc b
        ],
        out_specs=pl.BlockSpec((tb, 1), lambda i: (i, 0)),
        compiler_params=pltpu.CompilerParams(
            dimension_semantics=("parallel",),
            vmem_limit_bytes=int(vmem_limit_bytes),
        ),
    )(ids, table, wk, cb, fw, fb)

    return out[:B, 0]                                     # squeeze(1) -> (B,)


def cnn_classifier_forward(token_ids, prepared, batch_tile=None):
    """token_ids: (B, L) int32; prepared = prepare_params(params). -> (B,) f32."""
    B, L = token_ids.shape
    V_pad, E_pad = prepared["table"].shape
    K, _, F_pad = prepared["wk"].shape
    vmem_limit = _vmem_limit_bytes()
    tb = batch_tile if batch_tile is not None else _choose_batch_tile(
        B, L, K, E_pad, F_pad, V_pad, vmem_limit)
    return _forward_impl(token_ids, prepared["table"], prepared["wk"],
                         prepared["cb"], prepared["fw"], prepared["fb"],
                         batch_tile=int(tb), vmem_limit_bytes=int(vmem_limit))


# ---------------------------------------------------------------------------
# Pure-JAX reference (f32) for a correctness check
# ---------------------------------------------------------------------------
def reference_forward(token_ids, params):
    emb = params["embedding"][token_ids].astype(jnp.float32)        # (B, L, E)
    W, b = params["conv_w"], params["conv_b"]
    K = W.shape[2]
    Lout = emb.shape[1] - K + 1
    acc = b[None, None, :] + sum(
        jnp.einsum("ble,fe->blf", emb[:, k:k + Lout, :], W[:, :, k])
        for k in range(K))
    pooled = jnp.max(jnp.maximum(acc, 0.0), axis=1)                  # (B, F)
    return pooled @ params["fc_w"][0] + params["fc_b"][0]            # (B,)


# ---------------------------------------------------------------------------
# Deterministic parameter construction (shapes per CNNClassifier.__init__)
# ---------------------------------------------------------------------------
def make_params(key, vocab_size, embed_dim=50, num_filters=64, kernel_size=3):
    k1, k2, k3, k4, k5 = jax.random.split(key, 5)
    return {
        "embedding": jax.random.normal(k1, (vocab_size, embed_dim), jnp.float32),
        "conv_w": 0.1 * jax.random.normal(
            k2, (num_filters, embed_dim, kernel_size), jnp.float32),
        "conv_b": 0.1 * jax.random.normal(k3, (num_filters,), jnp.float32),
        "fc_w": 0.1 * jax.random.normal(k4, (1, num_filters), jnp.float32),
        "fc_b": 0.1 * jax.random.normal(k5, (1,), jnp.float32),
    }


if __name__ == "__main__":
    key = jax.random.PRNGKey(0)
    pkey, xkey, xkey2 = jax.random.split(key, 3)

    vocab_size, embed_dim, num_filters, kernel_size = 100, 50, 64, 3
    batch, seq_len = 2, 16

    params = make_params(pkey, vocab_size, embed_dim, num_filters, kernel_size)
    prepared = prepare_params(params)

    # Small-shape test (module defaults).
    token_ids = jax.random.randint(
        xkey, (batch, seq_len), 0, vocab_size, jnp.int32)
    logits = cnn_classifier_forward(token_ids, prepared)
    jax.block_until_ready(logits)
    assert logits.shape == (batch,), logits.shape
    assert logits.dtype == jnp.float32
    ref = reference_forward(token_ids, params)
    np.testing.assert_allclose(np.asarray(logits), np.asarray(ref),
                               rtol=5e-2, atol=5e-2)

    # Odd batch: exercises tile balancing, batch padding and the multi-step grid.
    token_ids2 = jax.random.randint(
        xkey2, (37, seq_len), 0, vocab_size, jnp.int32)
    logits2 = cnn_classifier_forward(token_ids2, prepared)
    jax.block_until_ready(logits2)
    ref2 = reference_forward(token_ids2, params)
    np.testing.assert_allclose(np.asarray(logits2), np.asarray(ref2),
                               rtol=5e-2, atol=5e-2)

    print("KERNEL_OK")
</pallas_src>

<mosaic_0001>
module attributes {stable_mosaic.version = 11 : i64} {
  func.func @cnn_head_kernel(%arg0: i32, %arg1: memref<8x16xi32, #tpu.memory_space<vmem>>, %arg2: memref<128x64xbf16, #tpu.memory_space<vmem>>, %arg3: memref<3x64x128xbf16, #tpu.memory_space<vmem>>, %arg4: memref<1x128xf32, #tpu.memory_space<vmem>>, %arg5: memref<1x128xf32, #tpu.memory_space<vmem>>, %arg6: memref<1x1xf32, #tpu.memory_space<vmem>>, %arg7: memref<8x1xf32, #tpu.memory_space<vmem>>) attributes {dimension_semantics = [#tpu.dimension_semantics<parallel>], iteration_bounds = array<i64: 1>, scalar_prefetch = 0 : i64, scratch_operands = 0 : i64, tpu.core_type = #tpu.core_type<tc>, window_params = [{transform_indices = @transform_0, window_bounds = array<i64: 8, 16>}, {pipeline_mode = #tpu.pipeline_mode<synchronous>, transform_indices = @transform_1, window_bounds = array<i64: 128, 64>}, {pipeline_mode = #tpu.pipeline_mode<synchronous>, transform_indices = @transform_2, window_bounds = array<i64: 3, 64, 128>}, {pipeline_mode = #tpu.pipeline_mode<synchronous>, transform_indices = @transform_3, window_bounds = array<i64: 1, 128>}, {pipeline_mode = #tpu.pipeline_mode<synchronous>, transform_indices = @transform_4, window_bounds = array<i64: 1, 128>}, {pipeline_mode = #tpu.pipeline_mode<synchronous>, transform_indices = @transform_5, window_bounds = array<i64: 1, 1>}, {transform_indices = @transform_6, window_bounds = array<i64: 8, 1>}]} {
    %c0 = arith.constant 0 : index
    %c0_0 = arith.constant 0 : index
    %0 = vector.load %arg1[%c0, %c0_0] : memref<8x16xi32, #tpu.memory_space<vmem>>, vector<8x16xi32>
    %1 = vector.shape_cast %0 : vector<8x16xi32> to vector<8x16x1xi32>
    %2 = tpu.iota {dimensions = array<i32: 2>} : vector<8x16x128xi32>
    %3 = vector.broadcast %1 : vector<8x16x1xi32> to vector<8x16x128xi32>
    %4 = arith.cmpi eq, %2, %3 : vector<8x16x128xi32>
    %5 = arith.extui %4 : vector<8x16x128xi1> to vector<8x16x128xi32>
    %6 = arith.sitofp %5 : vector<8x16x128xi32> to vector<8x16x128xf32>
    %7 = arith.truncf %6 : vector<8x16x128xf32> to vector<8x16x128xbf16>
    %8 = vector.shape_cast %7 : vector<8x16x128xbf16> to vector<128x128xbf16>
    %c0_1 = arith.constant 0 : index
    %c0_2 = arith.constant 0 : index
    %9 = vector.load %arg2[%c0_1, %c0_2] : memref<128x64xbf16, #tpu.memory_space<vmem>>, vector<128x64xbf16>
    %cst = arith.constant dense<0.000000e+00> : vector<128x64xf32>
    %10 = tpu.matmul %8, %9, %cst {dimension_numbers = #tpu.dot_dimension_numbers<[1], [0], [0], [1], [0, 0, 1, 1], [], []>} : vector<128x128xbf16>, vector<128x64xbf16>, vector<128x64xf32> -> vector<128x64xf32>
    %11 = arith.truncf %10 : vector<128x64xf32> to vector<128x64xbf16>
    %12 = vector.shape_cast %11 : vector<128x64xbf16> to vector<8x16x64xbf16>
    %cst_3 = arith.constant 0.000000e+00 : f32
    %13 = vector.broadcast %cst_3 : f32 to vector<112x128xf32>
    %14 = vector.extract_strided_slice %12 {offsets = [0, 0, 0], sizes = [8, 14, 64], strides = [1, 1, 1]} : vector<8x16x64xbf16> to vector<8x14x64xbf16>
    %15 = vector.shape_cast %14 : vector<8x14x64xbf16> to vector<112x64xbf16>
    %c0_4 = arith.constant 0 : index
    %c0_5 = arith.constant 0 : index
    %c0_6 = arith.constant 0 : index
    %16 = vector.load %arg3[%c0_4, %c0_5, %c0_6] : memref<3x64x128xbf16, #tpu.memory_space<vmem>>, vector<1x64x128xbf16>
    %17 = vector.shape_cast %16 : vector<1x64x128xbf16> to vector<64x128xbf16>
    %cst_7 = arith.constant dense<0.000000e+00> : vector<112x128xf32>
    %18 = tpu.matmul %15, %17, %cst_7 {dimension_numbers = #tpu.dot_dimension_numbers<[1], [0], [0], [1], [0, 0, 1, 1], [], []>} : vector<112x64xbf16>, vector<64x128xbf16>, vector<112x128xf32> -> vector<112x128xf32>
    %19 = arith.addf %13, %18 : vector<112x128xf32>
    %20 = vector.extract_strided_slice %12 {offsets = [0, 1, 0], sizes = [8, 14, 64], strides = [1, 1, 1]} : vector<8x16x64xbf16> to vector<8x14x64xbf16>
    %21 = vector.shape_cast %20 : vector<8x14x64xbf16> to vector<112x64xbf16>
    %c1 = arith.constant 1 : index
    %c0_8 = arith.constant 0 : index
    %c0_9 = arith.constant 0 : index
    %22 = vector.load %arg3[%c1, %c0_8, %c0_9] : memref<3x64x128xbf16, #tpu.memory_space<vmem>>, vector<1x64x128xbf16>
    %23 = vector.shape_cast %22 : vector<1x64x128xbf16> to vector<64x128xbf16>
    %cst_10 = arith.constant dense<0.000000e+00> : vector<112x128xf32>
    %24 = tpu.matmul %21, %23, %cst_10 {dimension_numbers = #tpu.dot_dimension_numbers<[1], [0], [0], [1], [0, 0, 1, 1], [], []>} : vector<112x64xbf16>, vector<64x128xbf16>, vector<112x128xf32> -> vector<112x128xf32>
    %25 = arith.addf %19, %24 : vector<112x128xf32>
    %26 = vector.extract_strided_slice %12 {offsets = [0, 2, 0], sizes = [8, 14, 64], strides = [1, 1, 1]} : vector<8x16x64xbf16> to vector<8x14x64xbf16>
    %27 = vector.shape_cast %26 : vector<8x14x64xbf16> to vector<112x64xbf16>
    %c2 = arith.constant 2 : index
    %c0_11 = arith.constant 0 : index
    %c0_12 = arith.constant 0 : index
    %28 = vector.load %arg3[%c2, %c0_11, %c0_12] : memref<3x64x128xbf16, #tpu.memory_space<vmem>>, vector<1x64x128xbf16>
    %29 = vector.shape_cast %28 : vector<1x64x128xbf16> to vector<64x128xbf16>
    %cst_13 = arith.constant dense<0.000000e+00> : vector<112x128xf32>
    %30 = tpu.matmul %27, %29, %cst_13 {dimension_numbers = #tpu.dot_dimension_numbers<[1], [0], [0], [1], [0, 0, 1, 1], [], []>} : vector<112x64xbf16>, vector<64x128xbf16>, vector<112x128xf32> -> vector<112x128xf32>
    %31 = arith.addf %25, %30 : vector<112x128xf32>
    %32 = vector.shape_cast %31 : vector<112x128xf32> to vector<8x14x128xf32>
    %cst_14 = arith.constant dense<0xFF800000> : vector<8x128xf32>
    %33 = vector.multi_reduction <maximumf>, %32, %cst_14 [1] : vector<8x14x128xf32> to vector<8x128xf32>
    %c0_15 = arith.constant 0 : index
    %c0_16 = arith.constant 0 : index
    %34 = vector.load %arg4[%c0_15, %c0_16] : memref<1x128xf32, #tpu.memory_space<vmem>>, vector<1x128xf32>
    %35 = vector.broadcast %34 : vector<1x128xf32> to vector<8x128xf32>
    %36 = arith.addf %33, %35 : vector<8x128xf32>
    %cst_17 = arith.constant 0.000000e+00 : f32
    %37 = vector.broadcast %cst_17 : f32 to vector<8x128xf32>
    %38 = arith.maximumf %36, %37 : vector<8x128xf32>
    %c0_18 = arith.constant 0 : index
    %c0_19 = arith.constant 0 : index
    %39 = vector.load %arg5[%c0_18, %c0_19] : memref<1x128xf32, #tpu.memory_space<vmem>>, vector<1x128xf32>
    %40 = vector.broadcast %39 : vector<1x128xf32> to vector<8x128xf32>
    %41 = arith.mulf %38, %40 : vector<8x128xf32>
    %cst_20 = arith.constant dense<0.000000e+00> : vector<8xf32>
    %42 = vector.multi_reduction <add>, %41, %cst_20 [1] : vector<8x128xf32> to vector<8xf32>
    %43 = vector.shape_cast %42 : vector<8xf32> to vector<8x1xf32>
    %c0_21 = arith.constant 0 : index
    %c0_22 = arith.constant 0 : index
    %44 = vector.load %arg6[%c0_21, %c0_22] : memref<1x1xf32, #tpu.memory_space<vmem>>, vector<1x1xf32>
    %45 = vector.broadcast %44 : vector<1x1xf32> to vector<8x1xf32>
    %46 = arith.addf %43, %45 : vector<8x1xf32>
    %c0_23 = arith.constant 0 : index
    %c0_24 = arith.constant 0 : index
    %47 = vector.load %arg7[%c0_23, %c0_24] : memref<8x1xf32, #tpu.memory_space<vmem>>, vector<8x1xf32>
    tpu.vector_store %arg7[%c0_23, %c0_24], %46 {strides = array<i32>} : memref<8x1xf32, #tpu.memory_space<vmem>>, vector<8x1xf32>,
    return
  }
  func.func @transform_0(%arg0: i32) -> (i32, i32) {
    %c0_i32 = arith.constant 0 : i32
    %c0_i32_0 = arith.constant 0 : i32
    return %arg0, %c0_i32 : i32, i32
  }
  func.func @transform_1(%arg0: i32) -> (i32, i32) {
    %c0_i32 = arith.constant 0 : i32
    %c0_i32_0 = arith.constant 0 : i32
    %c0_i32_1 = arith.constant 0 : i32
    return %c0_i32, %c0_i32_0 : i32, i32
  }
  func.func @transform_2(%arg0: i32) -> (i32, i32, i32) {
    %c0_i32 = arith.constant 0 : i32
    %c0_i32_0 = arith.constant 0 : i32
    %c0_i32_1 = arith.constant 0 : i32
    %c0_i32_2 = arith.constant 0 : i32
    return %c0_i32, %c0_i32_0, %c0_i32_1 : i32, i32, i32
  }
  func.func @transform_3(%arg0: i32) -> (i32, i32) {
    %c0_i32 = arith.constant 0 : i32
    %c0_i32_0 = arith.constant 0 : i32
    %c0_i32_1 = arith.constant 0 : i32
    return %c0_i32, %c0_i32_0 : i32, i32
  }
  func.func @transform_4(%arg0: i32) -> (i32, i32) {
    %c0_i32 = arith.constant 0 : i32
    %c0_i32_0 = arith.constant 0 : i32
    %c0_i32_1 = arith.constant 0 : i32
    return %c0_i32, %c0_i32_0 : i32, i32
  }
  func.func @transform_5(%arg0: i32) -> (i32, i32) {
    %c0_i32 = arith.constant 0 : i32
    %c0_i32_0 = arith.constant 0 : i32
    %c0_i32_1 = arith.constant 0 : i32
    return %c0_i32, %c0_i32_0 : i32, i32
  }
  func.func @transform_6(%arg0: i32) -> (i32, i32) {
    %c0_i32 = arith.constant 0 : i32
    %c0_i32_0 = arith.constant 0 : i32
    return %arg0, %c0_i32 : i32, i32
  }
}

</mosaic_0001>

<llo_original>
// kernel: _forward_impl.1
$region0: #{_forward_impl.1}
  #allocation0 [shape = 'u32[]', space=smem, size = 0x4, offset = 0x4, fixed_abs, tag = 'smem constant byte address 0x4 - core index']
  #allocation1 [shape = 'u32[72,128]{1,0:T(1,128)}', space=vmem, size = 0x9000, scoped, tag = 'internal scratch']
  #allocation2 [shape = 'f32[1,1]{1,0:T(1,128)S(1)}', space=vmem, size = 0x200, scoped, tag = 'scoped memory for _forward_impl.1']
  %s0 = inlined_call_operand.vmem [shape: s32[8,16], index: 0, kind: input, shape index: {}]
  %s1 = inlined_call_operand.vmem [shape: bf16[128,64], index: 1, kind: input, shape index: {}]
  %s2 = inlined_call_operand.vmem [shape: bf16[3,64,128], index: 2, kind: input, shape index: {}]
  %s3 = inlined_call_operand.vmem [shape: f32[1,128], index: 3, kind: input, shape index: {}]
  %s4 = inlined_call_operand.vmem [shape: f32[1,128], index: 4, kind: input, shape index: {}]
  %s5 = inlined_call_operand.<no memory space> [shape: f32[1,1], index: 5, kind: input, shape index: {}]
  %s6 = inlined_call_operand.vmem [shape: f32[8,1], index: 6, kind: output, shape index: {}]
  %s7 = sld [smem:[#allocation0]]
  $region34: #{_forward_impl.1} parent=0
    _
  %s9 = ssub.s32 1, %s7
  %s10 = scalar_select 0, %s9, %s7
  %v11 = vstv %s5
  %12 = vst [vmem:[#allocation2] sm:$0x1] %v11
  // Predicated region
  $region2: #{_forward_impl.1} parent=0 // pred_check
    _
  $region3: #{_forward_impl.1} parent=0 // pred_check_branch
    %14 = sbr.rel (0) target = $region5
  $region4: #{_forward_impl.1} parent=0 // pred_region
    _
  $region5: #{_forward_impl.1} parent=0 // pred_fallthru
    _
  // Predicated region
  $region6: #{_forward_impl.1} parent=0 // pred_check
    _
  $region7: #{_forward_impl.1} parent=0 // pred_check_branch
    %16 = sbr.rel (0) target = $region9
  $region8: #{_forward_impl.1} parent=0 // pred_region
    _
  $region9: #{_forward_impl.1} parent=0 // pred_fallthru
    _
  // Predicated region
  $region10: #{_forward_impl.1} parent=0 // pred_check
    _
  $region11: #{_forward_impl.1} parent=0 // pred_check_branch
    %18 = sbr.rel (0) target = $region13
  $region12: #{_forward_impl.1} parent=0 // pred_region
    _
  $region13: #{_forward_impl.1} parent=0 // pred_fallthru
    _
  // Predicated region
  $region14: #{_forward_impl.1} parent=0 // pred_check
    _
  $region15: #{_forward_impl.1} parent=0 // pred_check_branch
    %20 = sbr.rel (0) target = $region17
  $region16: #{_forward_impl.1} parent=0 // pred_region
    _
  $region17: #{_forward_impl.1} parent=0 // pred_fallthru
    _
  // Predicated region
  $region18: #{_forward_impl.1} parent=0 // pred_check
    _
  $region19: #{_forward_impl.1} parent=0 // pred_check_branch
    %22 = sbr.rel (0) target = $region21
  $region20: #{_forward_impl.1} parent=0 // pred_region
    _
  $region21: #{_forward_impl.1} parent=0 // pred_fallthru
    _
  // Predicated region
  $region22: #{_forward_impl.1} parent=0 // pred_check
    _
  $region23: #{_forward_impl.1} parent=0 // pred_check_branch
    %24 = sbr.rel (0) target = $region25
  $region24: #{_forward_impl.1} parent=0 // pred_region
    _
  $region25: #{_forward_impl.1} parent=0 // pred_fallthru
    _
  %v26 = vld [vmem:[%s0] sm:$0xff]
  %v27 = vperm.slane %v26, 0
  %v28 = vlaneseq
  %v29 = vshrl.u32 %v28, 7
  %31 = vset.pattern.permute.xlu0 %v29
  %32 = vperm.xlu0 %31, %v27
  %v33 = vpop.permute.xlu0 %32
  %v34 = vlaneseq
  %v35 = vshrl.u32 %v34, 7
  %v36 = vadd.s32 %v35, 8
  %37 = vset.pattern.permute.xlu0 %v36
  %38 = vperm.xlu0 %37, %v27
  %v39 = vpop.permute.xlu0 %38
  %v40 = vperm.slane %v26, 1
  %v41 = vlaneseq
  %v42 = vshrl.u32 %v41, 7
  %44 = vset.pattern.permute.xlu0 %v42
  %45 = vperm.xlu0 %44, %v40
  %v46 = vpop.permute.xlu0 %45
  %v47 = vlaneseq
  %v48 = vshrl.u32 %v47, 7
  %v49 = vadd.s32 %v48, 8
  %50 = vset.pattern.permute.xlu0 %v49
  %51 = vperm.xlu0 %50, %v40
  %v52 = vpop.permute.xlu0 %51
  %v53 = vperm.slane %v26, 2
  %v54 = vlaneseq
  %v55 = vshrl.u32 %v54, 7
  %57 = vset.pattern.permute.xlu0 %v55
  %58 = vperm.xlu0 %57, %v53
  %v59 = vpop.permute.xlu0 %58
  %v60 = vlaneseq
  %v61 = vshrl.u32 %v60, 7
  %v62 = vadd.s32 %v61, 8
  %63 = vset.pattern.permute.xlu0 %v62
  %64 = vperm.xlu0 %63, %v53
  %v65 = vpop.permute.xlu0 %64
  %v66 = vperm.slane %v26, 3
  %v67 = vlaneseq
  %v68 = vshrl.u32 %v67, 7
  %70 = vset.pattern.permute.xlu0 %v68
  %71 = vperm.xlu0 %70, %v66
  %v72 = vpop.permute.xlu0 %71
  %v73 = vlaneseq
  %v74 = vshrl.u32 %v73, 7
  %v75 = vadd.s32 %v74, 8
  %76 = vset.pattern.permute.xlu0 %v75
  %77 = vperm.xlu0 %76, %v66
  %v78 = vpop.permute.xlu0 %77
  %v79 = vperm.slane %v26, 4
  %v80 = vlaneseq
  %v81 = vshrl.u32 %v80, 7
  %83 = vset.pattern.permute.xlu0 %v81
  %84 = vperm.xlu0 %83, %v79
  %v85 = vpop.permute.xlu0 %84
  %v86 = vlaneseq
  %v87 = vshrl.u32 %v86, 7
  %v88 = vadd.s32 %v87, 8
  %89 = vset.pattern.permute.xlu0 %v88
  %90 = vperm.xlu0 %89, %v79
  %v91 = vpop.permute.xlu0 %90
  %v92 = vperm.slane %v26, 5
  %v93 = vlaneseq
  %v94 = vshrl.u32 %v93, 7
  %96 = vset.pattern.permute.xlu0 %v94
  %97 = vperm.xlu0 %96, %v92
  %v98 = vpop.permute.xlu0 %97
  %v99 = vlaneseq
  %v100 = vshrl.u32 %v99, 7
  %v101 = vadd.s32 %v100, 8
  %102 = vset.pattern.permute.xlu0 %v101
  %103 = vperm.xlu0 %102, %v92
  %v104 = vpop.permute.xlu0 %103
  %v105 = vperm.slane %v26, 6
  %v106 = vlaneseq
  %v107 = vshrl.u32 %v106, 7
  %109 = vset.pattern.permute.xlu0 %v107
  %110 = vperm.xlu0 %109, %v105
  %v111 = vpop.permute.xlu0 %110
  %v112 = vlaneseq
  %v113 = vshrl.u32 %v112, 7
  %v114 = vadd.s32 %v113, 8
  %115 = vset.pattern.permute.xlu0 %v114
  %116 = vperm.xlu0 %115, %v105
  %v117 = vpop.permute.xlu0 %116
  %v118 = vperm.slane %v26, 7
  %v119 = vlaneseq
  %v120 = vshrl.u32 %v119, 7
  %122 = vset.pattern.permute.xlu0 %v120
  %123 = vperm.xlu0 %122, %v118
  %v124 = vpop.permute.xlu0 %123
  %v125 = vlaneseq
  %v126 = vshrl.u32 %v125, 7
  %v127 = vadd.s32 %v126, 8
  %128 = vset.pattern.permute.xlu0 %v127
  %129 = vperm.xlu0 %128, %v118
  %v130 = vpop.permute.xlu0 %129
  %v131 = vlaneseq
  %v132 = vand.u32 %v131, 127
  %vm133 = vcmp.eq.s32.totalorder %v132, %v33
  %vm134 = vcmp.eq.s32.totalorder %v132, %v39
  %vm135 = vcmp.eq.s32.totalorder %v132, %v46
  %vm136 = vcmp.eq.s32.totalorder %v132, %v52
  %vm137 = vcmp.eq.s32.totalorder %v132, %v59
  %vm138 = vcmp.eq.s32.totalorder %v132, %v65
  %vm139 = vcmp.eq.s32.totalorder %v132, %v72
  %vm140 = vcmp.eq.s32.totalorder %v132, %v78
  %vm141 = vcmp.eq.s32.totalorder %v132, %v85
  %vm142 = vcmp.eq.s32.totalorder %v132, %v91
  %vm143 = vcmp.eq.s32.totalorder %v132, %v98
  %vm144 = vcmp.eq.s32.totalorder %v132, %v104
  %vm145 = vcmp.eq.s32.totalorder %v132, %v111
  %vm146 = vcmp.eq.s32.totalorder %v132, %v117
  %vm147 = vcmp.eq.s32.totalorder %v132, %v124
  %vm148 = vcmp.eq.s32.totalorder %v132, %v130
  %v149 = vsel %vm133, 1, 0
  %v150 = vsel %vm134, 1, 0
  %v151 = vsel %vm135, 1, 0
  %v152 = vsel %vm136, 1, 0
  %v153 = vsel %vm137, 1, 0
  %v154 = vsel %vm138, 1, 0
  %v155 = vsel %vm139, 1, 0
  %v156 = vsel %vm140, 1, 0
  %v157 = vsel %vm141, 1, 0
  %v158 = vsel %vm142, 1, 0
  %v159 = vsel %vm143, 1, 0
  %v160 = vsel %vm144, 1, 0
  %v161 = vsel %vm145, 1, 0
  %v162 = vsel %vm146, 1, 0
  %v163 = vsel %vm147, 1, 0
  %v164 = vsel %vm148, 1, 0
  %v165 = vcvt.s32.f32 %v149
  %v166 = vcvt.s32.f32 %v150
  %v167 = vcvt.s32.f32 %v151
  %v168 = vcvt.s32.f32 %v152
  %v169 = vcvt.s32.f32 %v153
  %v170 = vcvt.s32.f32 %v154
  %v171 = vcvt.s32.f32 %v155
  %v172 = vcvt.s32.f32 %v156
  %v173 = vcvt.s32.f32 %v157
  %v174 = vcvt.s32.f32 %v158
  %v175 = vcvt.s32.f32 %v159
  %v176 = vcvt.s32.f32 %v160
  %v177 = vcvt.s32.f32 %v161
  %v178 = vcvt.s32.f32 %v162
  %v179 = vcvt.s32.f32 %v163
  %v180 = vcvt.s32.f32 %v164
  %v181 = vpack.c.bf16 %v165, %v165
  %v182 = vpack.c.bf16 %v166, %v166
  %v183 = vpack.c.bf16 %v167, %v167
  %v184 = vpack.c.bf16 %v168, %v168
  %v185 = vpack.c.bf16 %v169, %v169
  %v186 = vpack.c.bf16 %v170, %v170
  %v187 = vpack.c.bf16 %v171, %v171
  %v188 = vpack.c.bf16 %v172, %v172
  %v189 = vpack.c.bf16 %v173, %v173
  %v190 = vpack.c.bf16 %v174, %v174
  %v191 = vpack.c.bf16 %v175, %v175
  %v192 = vpack.c.bf16 %v176, %v176
  %v193 = vpack.c.bf16 %v177, %v177
  %v194 = vpack.c.bf16 %v178, %v178
  %v195 = vpack.c.bf16 %v179, %v179
  %v196 = vpack.c.bf16 %v180, %v180
  %v197 = vld [vmem:[%s1] sm:$0xf]
  %v198 = vld [vmem:[%s1 + $0x4] sm:$0xf]
  %v199 = vld [vmem:[%s1 + $0x8] sm:$0xf]
  %v200 = vld [vmem:[%s1 + $0xc] sm:$0xf]
  %v201 = vld [vmem:[%s1 + $0x10] sm:$0xf]
  %v202 = vld [vmem:[%s1 + $0x14] sm:$0xf]
  %v203 = vld [vmem:[%s1 + $0x18] sm:$0xf]
  %v204 = vld [vmem:[%s1 + $0x1c] sm:$0xf]
  %v205 = vld [vmem:[%s1 + $0x20] sm:$0xf]
  %v206 = vld [vmem:[%s1 + $0x24] sm:$0xf]
  %v207 = vld [vmem:[%s1 + $0x28] sm:$0xf]
  %v208 = vld [vmem:[%s1 + $0x2c] sm:$0xf]
  %v209 = vld [vmem:[%s1 + $0x30] sm:$0xf]
  %v210 = vld [vmem:[%s1 + $0x34] sm:$0xf]
  %v211 = vld [vmem:[%s1 + $0x38] sm:$0xf]
  %v212 = vld [vmem:[%s1 + $0x3c] sm:$0xf]
  %v229 = vunpack.c.l.b16 %v181
  %v230 = vunpack.c.l.b16 %v182
  %v231 = vunpack.c.l.b16 %v183
  %v232 = vunpack.c.l.b16 %v184
  %v233 = vunpack.c.l.b16 %v185
  %v234 = vunpack.c.l.b16 %v186
  %v235 = vunpack.c.l.b16 %v187
  %v236 = vunpack.c.l.b16 %v188
  %v237 = vunpack.c.l.b16 %v189
  %v238 = vunpack.c.l.b16 %v190
  %v239 = vunpack.c.l.b16 %v191
  %v240 = vunpack.c.l.b16 %v192
  %v241 = vunpack.c.l.b16 %v193
  %v242 = vunpack.c.l.b16 %v194
  %v243 = vunpack.c.l.b16 %v195
  %v244 = vunpack.c.l.b16 %v196
  %v245 = vpack.c.b16 %v230, %v229
  %v246 = vpack.c.b16 %v232, %v231
  %v247 = vpack.c.b16 %v234, %v233
  %v248 = vpack.c.b16 %v236, %v235
  %v249 = vpack.c.b16 %v238, %v237
  %v250 = vpack.c.b16 %v240, %v239
  %v251 = vpack.c.b16 %v242, %v241
  %v252 = vpack.c.b16 %v244, %v243
  %v277 = vunpack.c.l.b16 %v197
  %v278 = vunpack.c.l.b16 %v198
  %v279 = vunpack.c.l.b16 %v199
  %v280 = vunpack.c.l.b16 %v200
  %v281 = vunpack.c.l.b16 %v201
  %v282 = vunpack.c.l.b16 %v202
  %v283 = vunpack.c.l.b16 %v203
  %v284 = vunpack.c.l.b16 %v204
  %v285 = vunpack.c.l.b16 %v205
  %v286 = vunpack.c.l.b16 %v206
  %v287 = vunpack.c.l.b16 %v207
  %v288 = vunpack.c.l.b16 %v208
  %v289 = vunpack.c.l.b16 %v209
  %v290 = vunpack.c.l.b16 %v210
  %v291 = vunpack.c.l.b16 %v211
  %v292 = vunpack.c.l.b16 %v212
  %v293 = vpack.c.b16 %v278, %v277
  %v294 = vpack.c.b16 %v280, %v279
  %v295 = vpack.c.b16 %v282, %v281
  %v296 = vpack.c.b16 %v284, %v283
  %v297 = vpack.c.b16 %v286, %v285
  %v298 = vpack.c.b16 %v288, %v287
  %v299 = vpack.c.b16 %v290, %v289
  %v300 = vpack.c.b16 %v292, %v291
  %309 = vmatpush.bf16.msra.mxu0 %v300
  %310 = vmatpush.bf16.msra.mxu0 %v299
  %311 = vmatpush.bf16.msra.mxu0 %v298
  %312 = vmatpush.bf16.msra.mxu0 %v297
  %313 = vmatpush.bf16.msra.mxu0 %v296
  %314 = vmatpush.bf16.msra.mxu0 %v295
  %315 = vmatpush.bf16.msra.mxu0 %v294
  %316 = vmatpush.bf16.msra.mxu0 %v293
  %317 = vmatmul.bf16.gmra.mxu0 %v245
  %v318 = vpop.f32.mrf.mxu0
  %v319 = vadd.f32 0.0, %v318
  %v320 = vpop.f32.mrf.mxu0
  %v321 = vadd.f32 0.0, %v320
  %322 = vmatmul.bf16.gmra.mxu0 %v246
  %v323 = vpop.f32.mrf.mxu0
  %v324 = vadd.f32 0.0, %v323
  %v325 = vpop.f32.mrf.mxu0
  %v326 = vadd.f32 0.0, %v325
  %327 = vmatmul.bf16.gmra.mxu0 %v247
  %v328 = vpop.f32.mrf.mxu0
  %v329 = vadd.f32 0.0, %v328
  %v330 = vpop.f32.mrf.mxu0
  %v331 = vadd.f32 0.0, %v330
  %332 = vmatmul.bf16.gmra.mxu0 %v248
  %v333 = vpop.f32.mrf.mxu0
  %v334 = vadd.f32 0.0, %v333
  %v335 = vpop.f32.mrf.mxu0
  %v336 = vadd.f32 0.0, %v335
  %337 = vmatmul.bf16.gmra.mxu0 %v249
  %v338 = vpop.f32.mrf.mxu0
  %v339 = vadd.f32 0.0, %v338
  %v340 = vpop.f32.mrf.mxu0
  %v341 = vadd.f32 0.0, %v340
  %342 = vmatmul.bf16.gmra.mxu0 %v250
  %v343 = vpop.f32.mrf.mxu0
  %v344 = vadd.f32 0.0, %v343
  %v345 = vpop.f32.mrf.mxu0
  %v346 = vadd.f32 0.0, %v345
  %347 = vmatmul.bf16.gmra.mxu0 %v251
  %v348 = vpop.f32.mrf.mxu0
  %v349 = vadd.f32 0.0, %v348
  %v350 = vpop.f32.mrf.mxu0
  %v351 = vadd.f32 0.0, %v350
  %352 = vmatmul.bf16.gmra.mxu0 %v252
  %v353 = vpop.f32.mrf.mxu0
  %v354 = vadd.f32 0.0, %v353
  %v355 = vpop.f32.mrf.mxu0
  %v356 = vadd.f32 0.0, %v355
  %357 = vdwg.mxu0
  %v358 = vpack.c.bf16 %v319, %v319
  %v359 = vpack.c.bf16 %v321, %v321
  %v360 = vpack.c.bf16 %v324, %v324
  %v361 = vpack.c.bf16 %v326, %v326
  %v362 = vpack.c.bf16 %v329, %v329
  %v363 = vpack.c.bf16 %v331, %v331
  %v364 = vpack.c.bf16 %v334, %v334
  %v365 = vpack.c.bf16 %v336, %v336
  %v366 = vpack.c.bf16 %v339, %v339
  %v367 = vpack.c.bf16 %v341, %v341
  %v368 = vpack.c.bf16 %v344, %v344
  %v369 = vpack.c.bf16 %v346, %v346
  %v370 = vpack.c.bf16 %v349, %v349
  %v371 = vpack.c.bf16 %v351, %v351
  %v372 = vpack.c.bf16 %v354, %v354
  %v373 = vpack.c.bf16 %v356, %v356
  %v390 = vrot.slane %v358, 3
  %v391 = vrot.slane %v359, 3
  %v392 = vrot.slane %v360, 3
  %v393 = vrot.slane %v361, 3
  %v394 = vrot.slane %v362, 3
  %v395 = vrot.slane %v363, 3
  %v396 = vrot.slane %v364, 3
  %v397 = vrot.slane %v365, 3
  %v398 = vrot.slane %v366, 3
  %v399 = vrot.slane %v367, 3
  %v400 = vrot.slane %v368, 3
  %v401 = vrot.slane %v369, 3
  %v402 = vrot.slane %v370, 3
  %v403 = vrot.slane %v371, 3
  %v404 = vrot.slane %v372, 3
  %v405 = vrot.slane %v373, 3
  %vm406 = vcmask 1040384
  %v409 = vsel %vm406, %v358, %v390
  %vm410 = vcmask 1041409
  %v411 = vsel %vm410, %v358, %v390
  %v413 = vrot.slane %v411, 1
  %vm414 = vcmask 1042434
  %v415 = vsel %vm414, %v358, %v390
  %v417 = vrot.slane %v415, 2
  %vm418 = vcmask 1043459
  %v419 = vsel %vm418, %v358, %v390
  %v421 = vrot.slane %v419, 3
  %v424 = vsel %vm406, %v359, %v391
  %v425 = vsel %vm410, %v359, %v391
  %v427 = vrot.slane %v425, 1
  %v428 = vsel %vm414, %v359, %v391
  %v430 = vrot.slane %v428, 2
  %v433 = vsel %vm406, %v360, %v392
  %v434 = vsel %vm410, %v360, %v392
  %v436 = vrot.slane %v434, 1
  %v437 = vsel %vm414, %v360, %v392
  %v439 = vrot.slane %v437, 2
  %v440 = vsel %vm418, %v360, %v392
  %v442 = vrot.slane %v440, 3
  %v445 = vsel %vm406, %v361, %v393
  %v446 = vsel %vm410, %v361, %v393
  %v448 = vrot.slane %v446, 1
  %v449 = vsel %vm414, %v361, %v393
  %v451 = vrot.slane %v449, 2
  %v454 = vsel %vm406, %v362, %v394
  %v455 = vsel %vm410, %v362, %v394
  %v457 = vrot.slane %v455, 1
  %v458 = vsel %vm414, %v362, %v394
  %v460 = vrot.slane %v458, 2
  %v461 = vsel %vm418, %v362, %v394
  %v463 = vrot.slane %v461, 3
  %v466 = vsel %vm406, %v363, %v395
  %v467 = vsel %vm410, %v363, %v395
  %v469 = vrot.slane %v467, 1
  %v470 = vsel %vm414, %v363, %v395
  %v472 = vrot.slane %v470, 2
  %v475 = vsel %vm406, %v364, %v396
  %v476 = vsel %vm410, %v364, %v396
  %v478 = vrot.slane %v476, 1
  %v479 = vsel %vm414, %v364, %v396
  %v481 = vrot.slane %v479, 2
  %v482 = vsel %vm418, %v364, %v396
  %v484 = vrot.slane %v482, 3
  %v487 = vsel %vm406, %v365, %v397
  %v488 = vsel %vm410, %v365, %v397
  %v490 = vrot.slane %v488, 1
  %v491 = vsel %vm414, %v365, %v397
  %v493 = vrot.slane %v491, 2
  %v496 = vsel %vm406, %v366, %v398
  %v497 = vsel %vm410, %v366, %v398
  %v499 = vrot.slane %v497, 1
  %v500 = vsel %vm414, %v366, %v398
  %v502 = vrot.slane %v500, 2
  %v503 = vsel %vm418, %v366, %v398
  %v505 = vrot.slane %v503, 3
  %v508 = vsel %vm406, %v367, %v399
  %v509 = vsel %vm410, %v367, %v399
  %v511 = vrot.slane %v509, 1
  %v512 = vsel %vm414, %v367, %v399
  %v514 = vrot.slane %v512, 2
  %v517 = vsel %vm406, %v368, %v400
  %v518 = vsel %vm410, %v368, %v400
  %v520 = vrot.slane %v518, 1
  %v521 = vsel %vm414, %v368, %v400
  %v523 = vrot.slane %v521, 2
  %v524 = vsel %vm418, %v368, %v400
  %v526 = vrot.slane %v524, 3
  %v529 = vsel %vm406, %v369, %v401
  %v530 = vsel %vm410, %v369, %v401
  %v532 = vrot.slane %v530, 1
  %v533 = vsel %vm414, %v369, %v401
  %v535 = vrot.slane %v533, 2
  %v538 = vsel %vm406, %v370, %v402
  %v539 = vsel %vm410, %v370, %v402
  %v541 = vrot.slane %v539, 1
  %v542 = vsel %vm414, %v370, %v402
  %v544 = vrot.slane %v542, 2
  %v545 = vsel %vm418, %v370, %v402
  %v547 = vrot.slane %v545, 3
  %v550 = vsel %vm406, %v371, %v403
  %v551 = vsel %vm410, %v371, %v403
  %v553 = vrot.slane %v551, 1
  %v554 = vsel %vm414, %v371, %v403
  %v556 = vrot.slane %v554, 2
  %v559 = vsel %vm406, %v372, %v404
  %v560 = vsel %vm410, %v372, %v404
  %v562 = vrot.slane %v560, 1
  %v563 = vsel %vm414, %v372, %v404
  %v565 = vrot.slane %v563, 2
  %v566 = vsel %vm418, %v372, %v404
  %v568 = vrot.slane %v566, 3
  %v571 = vsel %vm406, %v373, %v405
  %v572 = vsel %vm410, %v373, %v405
  %v574 = vrot.slane %v572, 1
  %v575 = vsel %vm414, %v373, %v405
  %v577 = vrot.slane %v575, 2
  %v578 = vld [vmem:[%s2] sm:$0xf]
  %v579 = vld [vmem:[%s2 + $0x4] sm:$0xf]
  %v580 = vld [vmem:[%s2 + $0x8] sm:$0xf]
  %v581 = vld [vmem:[%s2 + $0xc] sm:$0xf]
  %v582 = vld [vmem:[%s2 + $0x10] sm:$0xf]
  %v583 = vld [vmem:[%s2 + $0x14] sm:$0xf]
  %v584 = vld [vmem:[%s2 + $0x18] sm:$0xf]
  %v585 = vld [vmem:[%s2 + $0x1c] sm:$0xf]
  %v586 = vsel %vm418, %v359, %v391
  %v588 = vrot.slane %v586, 3
  %v589 = vsel %vm418, %v361, %v393
  %v591 = vrot.slane %v589, 3
  %v592 = vsel %vm418, %v363, %v395
  %v594 = vrot.slane %v592, 3
  %v595 = vsel %vm418, %v365, %v397
  %v597 = vrot.slane %v595, 3
  %v598 = vsel %vm418, %v367, %v399
  %v600 = vrot.slane %v598, 3
  %v601 = vsel %vm418, %v369, %v401
  %v603 = vrot.slane %v601, 3
  %v604 = vsel %vm418, %v371, %v403
  %v606 = vrot.slane %v604, 3
  %v607 = vsel %vm418, %v373, %v405
  %v609 = vrot.slane %v607, 3
  %vm610 = vsmask.f32 256
  %vm611 = vsmask.f32 1284
  %vm612 = vmor %vm610, %vm611
  %vm613 = vsmask.f32 2312
  %vm614 = vmor %vm612, %vm613
  %vm615 = vsmask.f32 3340
  %vm616 = vmor %vm614, %vm615
  %vm617 = vsmask.f32 4368
  %vm618 = vmor %vm616, %vm617
  %vm619 = vsmask.f32 5396
  %vm620 = vmor %vm618, %vm619
  %vm621 = vsmask.f32 6424
  %vm622 = vmor %vm620, %vm621
  %vm623 = vsmask.f32 7452
  %vm624 = vmor %vm622, %vm623
  %v625 = vshrl.u32 %v409, 16
  %v627 = vrot.slane %v625, 7
  %v628 = vrot.slane %v627, 1
  %v630 = vshll.u32 %v413, 16
  %v632 = vsel %vm624, %v628, %v630
  %v633 = vshrl.u32 %v413, 16
  %v635 = vrot.slane %v633, 7
  %v636 = vrot.slane %v635, 1
  %v638 = vshll.u32 %v417, 16
  %v640 = vsel %vm624, %v636, %v638
  %v641 = vshrl.u32 %v417, 16
  %v643 = vrot.slane %v641, 7
  %v644 = vrot.slane %v643, 1
  %v646 = vshll.u32 %v421, 16
  %v648 = vsel %vm624, %v644, %v646
  %v649 = vshrl.u32 %v421, 16
  %v651 = vrot.slane %v649, 7
  %v652 = vrot.slane %v651, 1
  %v653 = vshll.u32 %v424, 16
  %v655 = vsel %vm624, %v652, %v653
  %v656 = vshrl.u32 %v424, 16
  %v658 = vrot.slane %v656, 7
  %v659 = vrot.slane %v658, 1
  %v661 = vshll.u32 %v427, 16
  %v663 = vsel %vm624, %v659, %v661
  %v664 = vshrl.u32 %v427, 16
  %v666 = vrot.slane %v664, 7
  %v667 = vrot.slane %v666, 1
  %v669 = vshll.u32 %v430, 16
  %v671 = vsel %vm624, %v667, %v669
  %v672 = vshrl.u32 %v430, 16
  %v674 = vrot.slane %v672, 7
  %v675 = vrot.slane %v674, 1
  %v677 = vshll.u32 %v588, 16
  %v679 = vsel %vm624, %v675, %v677
  %v680 = vshrl.u32 %v433, 16
  %v682 = vrot.slane %v680, 7
  %v683 = vrot.slane %v682, 1
  %v685 = vshll.u32 %v436, 16
  %v687 = vsel %vm624, %v683, %v685
  %v688 = vshrl.u32 %v436, 16
  %v690 = vrot.slane %v688, 7
  %v691 = vrot.slane %v690, 1
  %v693 = vshll.u32 %v439, 16
  %v695 = vsel %vm624, %v691, %v693
  %v696 = vshrl.u32 %v439, 16
  %v698 = vrot.slane %v696, 7
  %v699 = vrot.slane %v698, 1
  %v701 = vshll.u32 %v442, 16
  %v703 = vsel %vm624, %v699, %v701
  %v704 = vshrl.u32 %v442, 16
  %v706 = vrot.slane %v704, 7
  %v707 = vrot.slane %v706, 1
  %v708 = vshll.u32 %v445, 16
  %v710 = vsel %vm624, %v707, %v708
  %v711 = vshrl.u32 %v445, 16
  %v713 = vrot.slane %v711, 7
  %v714 = vrot.slane %v713, 1
  %v716 = vshll.u32 %v448, 16
  %v718 = vsel %vm624, %v714, %v716
  %v719 = vshrl.u32 %v448, 16
  %v721 = vrot.slane %v719, 7
  %v722 = vrot.slane %v721, 1
  %v724 = vshll.u32 %v451, 16
  %v726 = vsel %vm624, %v722, %v724
  %v727 = vshrl.u32 %v451, 16
  %v729 = vrot.slane %v727, 7
  %v730 = vrot.slane %v729, 1
  %v732 = vshll.u32 %v591, 16
  %v734 = vsel %vm624, %v730, %v732
  %v735 = vshrl.u32 %v454, 16
  %v737 = vrot.slane %v735, 7
  %v738 = vrot.slane %v737, 1
  %v740 = vshll.u32 %v457, 16
  %v742 = vsel %vm624, %v738, %v740
  %v743 = vshrl.u32 %v457, 16
  %v745 = vrot.slane %v743, 7
  %v746 = vrot.slane %v745, 1
  %v748 = vshll.u32 %v460, 16
  %v750 = vsel %vm624, %v746, %v748
  %v751 = vshrl.u32 %v460, 16
  %v753 = vrot.slane %v751, 7
  %v754 = vrot.slane %v753, 1
  %v756 = vshll.u32 %v463, 16
  %v758 = vsel %vm624, %v754, %v756
  %v759 = vshrl.u32 %v463, 16
  %v761 = vrot.slane %v759, 7
  %v762 = vrot.slane %v761, 1
  %v763 = vshll.u32 %v466, 16
  %v765 = vsel %vm624, %v762, %v763
  %v766 = vshrl.u32 %v466, 16
  %v768 = vrot.slane %v766, 7
  %v769 = vrot.slane %v768, 1
  %v771 = vshll.u32 %v469, 16
  %v773 = vsel %vm624, %v769, %v771
  %v774 = vshrl.u32 %v469, 16
  %v776 = vrot.slane %v774, 7
  %v777 = vrot.slane %v776, 1
  %v779 = vshll.u32 %v472, 16
  %v781 = vsel %vm624, %v777, %v779
  %v782 = vshrl.u32 %v472, 16
  %v784 = vrot.slane %v782, 7
  %v785 = vrot.slane %v784, 1
  %v787 = vshll.u32 %v594, 16
  %v789 = vsel %vm624, %v785, %v787
  %v790 = vshrl.u32 %v475, 16
  %v792 = vrot.slane %v790, 7
  %v793 = vrot.slane %v792, 1
  %v795 = vshll.u32 %v478, 16
  %v797 = vsel %vm624, %v793, %v795
  %v798 = vshrl.u32 %v478, 16
  %v800 = vrot.slane %v798, 7
  %v801 = vrot.slane %v800, 1
  %v803 = vshll.u32 %v481, 16
  %v805 = vsel %vm624, %v801, %v803
  %v806 = vshrl.u32 %v481, 16
  %v808 = vrot.slane %v806, 7
  %v809 = vrot.slane %v808, 1
  %v811 = vshll.u32 %v484, 16
  %v813 = vsel %vm624, %v809, %v811
  %v814 = vshrl.u32 %v484, 16
  %v816 = vrot.slane %v814, 7
  %v817 = vrot.slane %v816, 1
  %v818 = vshll.u32 %v487, 16
  %v820 = vsel %vm624, %v817, %v818
  %v821 = vshrl.u32 %v487, 16
  %v823 = vrot.slane %v821, 7
  %v824 = vrot.slane %v823, 1
  %v826 = vshll.u32 %v490, 16
  %v828 = vsel %vm624, %v824, %v826
  %v829 = vshrl.u32 %v490, 16
  %v831 = vrot.slane %v829, 7
  %v832 = vrot.slane %v831, 1
  %v834 = vshll.u32 %v493, 16
  %v836 = vsel %vm624, %v832, %v834
  %v837 = vshrl.u32 %v493, 16
  %v839 = vrot.slane %v837, 7
  %v840 = vrot.slane %v839, 1
  %v842 = vshll.u32 %v597, 16
  %v844 = vsel %vm624, %v840, %v842
  %v845 = vshrl.u32 %v496, 16
  %v847 = vrot.slane %v845, 7
  %v848 = vrot.slane %v847, 1
  %v850 = vshll.u32 %v499, 16
  %v852 = vsel %vm624, %v848, %v850
  %v853 = vshrl.u32 %v499, 16
  %v855 = vrot.slane %v853, 7
  %v856 = vrot.slane %v855, 1
  %v858 = vshll.u32 %v502, 16
  %v860 = vsel %vm624, %v856, %v858
  %v861 = vshrl.u32 %v502, 16
  %v863 = vrot.slane %v861, 7
  %v864 = vrot.slane %v863, 1
  %v866 = vshll.u32 %v505, 16
  %v868 = vsel %vm624, %v864, %v866
  %v869 = vshrl.u32 %v505, 16
  %v871 = vrot.slane %v869, 7
  %v872 = vrot.slane %v871, 1
  %v873 = vshll.u32 %v508, 16
  %v875 = vsel %vm624, %v872, %v873
  %v876 = vshrl.u32 %v508, 16
  %v878 = vrot.slane %v876, 7
  %v879 = vrot.slane %v878, 1
  %v881 = vshll.u32 %v511, 16
  %v883 = vsel %vm624, %v879, %v881
  %v884 = vshrl.u32 %v511, 16
  %v886 = vrot.slane %v884, 7
  %v887 = vrot.slane %v886, 1
  %v889 = vshll.u32 %v514, 16
  %v891 = vsel %vm624, %v887, %v889
  %v892 = vshrl.u32 %v514, 16
  %v894 = vrot.slane %v892, 7
  %v895 = vrot.slane %v894, 1
  %v897 = vshll.u32 %v600, 16
  %v899 = vsel %vm624, %v895, %v897
  %v900 = vshrl.u32 %v517, 16
  %v902 = vrot.slane %v900, 7
  %v903 = vrot.slane %v902, 1
  %v905 = vshll.u32 %v520, 16
  %v907 = vsel %vm624, %v903, %v905
  %v908 = vshrl.u32 %v520, 16
  %v910 = vrot.slane %v908, 7
  %v911 = vrot.slane %v910, 1
  %v913 = vshll.u32 %v523, 16
  %v915 = vsel %vm624, %v911, %v913
  %v916 = vshrl.u32 %v523, 16
  %v918 = vrot.slane %v916, 7
  %v919 = vrot.slane %v918, 1
  %v921 = vshll.u32 %v526, 16
  %v923 = vsel %vm624, %v919, %v921
  %v924 = vshrl.u32 %v526, 16
  %v926 = vrot.slane %v924, 7
  %v927 = vrot.slane %v926, 1
  %v928 = vshll.u32 %v529, 16
  %v930 = vsel %vm624, %v927, %v928
  %v931 = vshrl.u32 %v529, 16
  %v933 = vrot.slane %v931, 7
  %v934 = vrot.slane %v933, 1
  %v936 = vshll.u32 %v532, 16
  %v938 = vsel %vm624, %v934, %v936
  %v939 = vshrl.u32 %v532, 16
  %v941 = vrot.slane %v939, 7
  %v942 = vrot.slane %v941, 1
  %v944 = vshll.u32 %v535, 16
  %v946 = vsel %vm624, %v942, %v944
  %v947 = vshrl.u32 %v535, 16
  %v949 = vrot.slane %v947, 7
  %v950 = vrot.slane %v949, 1
  %v952 = vshll.u32 %v603, 16
  %v954 = vsel %vm624, %v950, %v952
  %v955 = vshrl.u32 %v538, 16
  %v957 = vrot.slane %v955, 7
  %v958 = vrot.slane %v957, 1
  %v960 = vshll.u32 %v541, 16
  %v962 = vsel %vm624, %v958, %v960
  %v963 = vshrl.u32 %v541, 16
  %v965 = vrot.slane %v963, 7
  %v966 = vrot.slane %v965, 1
  %v968 = vshll.u32 %v544, 16
  %v970 = vsel %vm624, %v966, %v968
  %v971 = vshrl.u32 %v544, 16
  %v973 = vrot.slane %v971, 7
  %v974 = vrot.slane %v973, 1
  %v976 = vshll.u32 %v547, 16
  %v978 = vsel %vm624, %v974, %v976
  %v979 = vshrl.u32 %v547, 16
  %v981 = vrot.slane %v979, 7
  %v982 = vrot.slane %v981, 1
  %v983 = vshll.u32 %v550, 16
  %v985 = vsel %vm624, %v982, %v983
  %v986 = vshrl.u32 %v550, 16
  %v988 = vrot.slane %v986, 7
  %v989 = vrot.slane %v988, 1
  %v991 = vshll.u32 %v553, 16
  %v993 = vsel %vm624, %v989, %v991
  %v994 = vshrl.u32 %v553, 16
  %v996 = vrot.slane %v994, 7
  %v997 = vrot.slane %v996, 1
  %v999 = vshll.u32 %v556, 16
  %v1001 = vsel %vm624, %v997, %v999
  %v1002 = vshrl.u32 %v556, 16
  %v1004 = vrot.slane %v1002, 7
  %v1005 = vrot.slane %v1004, 1
  %v1007 = vshll.u32 %v606, 16
  %v1009 = vsel %vm624, %v1005, %v1007
  %v1010 = vshrl.u32 %v559, 16
  %v1012 = vrot.slane %v1010, 7
  %v1013 = vrot.slane %v1012, 1
  %v1015 = vshll.u32 %v562, 16
  %v1017 = vsel %vm624, %v1013, %v1015
  %v1018 = vshrl.u32 %v562, 16
  %v1020 = vrot.slane %v1018, 7
  %v1021 = vrot.slane %v1020, 1
  %v1023 = vshll.u32 %v565, 16
  %v1025 = vsel %vm624, %v1021, %v1023
  %v1026 = vshrl.u32 %v565, 16
  %v1028 = vrot.slane %v1026, 7
  %v1029 = vrot.slane %v1028, 1
  %v1031 = vshll.u32 %v568, 16
  %v1033 = vsel %vm624, %v1029, %v1031
  %v1034 = vshrl.u32 %v568, 16
  %v1036 = vrot.slane %v1034, 7
  %v1037 = vrot.slane %v1036, 1
  %v1038 = vshll.u32 %v571, 16
  %v1040 = vsel %vm624, %v1037, %v1038
  %v1041 = vshrl.u32 %v571, 16
  %v1043 = vrot.slane %v1041, 7
  %v1044 = vrot.slane %v1043, 1
  %v1046 = vshll.u32 %v574, 16
  %v1048 = vsel %vm624, %v1044, %v1046
  %v1049 = vshrl.u32 %v574, 16
  %v1051 = vrot.slane %v1049, 7
  %v1052 = vrot.slane %v1051, 1
  %v1054 = vshll.u32 %v577, 16
  %v1056 = vsel %vm624, %v1052, %v1054
  %v1057 = vshrl.u32 %v577, 16
  %v1059 = vrot.slane %v1057, 7
  %v1060 = vrot.slane %v1059, 1
  %v1062 = vshll.u32 %v609, 16
  %v1064 = vsel %vm624, %v1060, %v1062
  %s1065 = scalar_lea.vmem %s2, 32
  %v1066 = vld [vmem:[%s1065] sm:$0xf]
  %v1067 = vld [vmem:[%s1065 + $0x4] sm:$0xf]
  %v1068 = vld [vmem:[%s1065 + $0x8] sm:$0xf]
  %v1069 = vld [vmem:[%s1065 + $0xc] sm:$0xf]
  %v1070 = vld [vmem:[%s1065 + $0x10] sm:$0xf]
  %v1071 = vld [vmem:[%s1065 + $0x14] sm:$0xf]
  %v1072 = vld [vmem:[%s1065 + $0x18] sm:$0xf]
  %v1073 = vld [vmem:[%s1065 + $0x1c] sm:$0xf]
  %1075 = vst [vmem:[#allocation1] ss:$9 sm:$0xff] %v632
  %s1077 = scalar_lea.vmem [#allocation1], 1
  %1078 = vst [vmem:[%s1077] ss:$9 sm:$0xff] %v640
  %s1080 = scalar_lea.vmem [#allocation1], 2
  %1081 = vst [vmem:[%s1080] ss:$9 sm:$0xff] %v648
  %s1083 = scalar_lea.vmem [#allocation1], 3
  %1084 = vst [vmem:[%s1083] ss:$9 sm:$0xff] %v655
  %s1086 = scalar_lea.vmem [#allocation1], 4
  %1087 = vst [vmem:[%s1086] ss:$9 sm:$0xff] %v663
  %s1089 = scalar_lea.vmem [#allocation1], 5
  %1090 = vst [vmem:[%s1089] ss:$9 sm:$0xff] %v671
  %s1092 = scalar_lea.vmem [#allocation1], 6
  %1093 = vst [vmem:[%s1092] ss:$9 sm:$0xff] %v679
  %s1095 = scalar_lea.vmem [#allocation1], 7
  %1096 = vst [vmem:[%s1095] ss:$9 sm:$0xff] %v687
  %v1097 = vld [vmem:[#allocation1] sm:$0xff]
  %1099 = vst [vmem:[#allocation1] ss:$9 sm:$0xff] %v695
  %1101 = vst [vmem:[%s1077] ss:$9 sm:$0xff] %v703
  %1103 = vst [vmem:[%s1080] ss:$9 sm:$0xff] %v710
  %1105 = vst [vmem:[%s1083] ss:$9 sm:$0xff] %v718
  %1107 = vst [vmem:[%s1086] ss:$9 sm:$0xff] %v726
  %1109 = vst [vmem:[%s1089] ss:$9 sm:$0xff] %v734
  %1111 = vst [vmem:[%s1092] ss:$9 sm:$0xff] %v742
  %1113 = vst [vmem:[%s1095] ss:$9 sm:$0xff] %v750
  %v1114 = vld [vmem:[#allocation1] sm:$0xff]
  %1116 = vst [vmem:[#allocation1] ss:$9 sm:$0xff] %v758
  %1118 = vst [vmem:[%s1077] ss:$9 sm:$0xff] %v765
  %1120 = vst [vmem:[%s1080] ss:$9 sm:$0xff] %v773
  %1122 = vst [vmem:[%s1083] ss:$9 sm:$0xff] %v781
  %1124 = vst [vmem:[%s1086] ss:$9 sm:$0xff] %v789
  %1126 = vst [vmem:[%s1089] ss:$9 sm:$0xff] %v797
  %1128 = vst [vmem:[%s1092] ss:$9 sm:$0xff] %v805
  %1130 = vst [vmem:[%s1095] ss:$9 sm:$0xff] %v813
  %v1131 = vld [vmem:[#allocation1] sm:$0xff]
  %1133 = vst [vmem:[#allocation1] ss:$9 sm:$0xff] %v820
  %1135 = vst [vmem:[%s1077] ss:$9 sm:$0xff] %v828
  %1137 = vst [vmem:[%s1080] ss:$9 sm:$0xff] %v836
  %1139 = vst [vmem:[%s1083] ss:$9 sm:$0xff] %v844
  %1141 = vst [vmem:[%s1086] ss:$9 sm:$0xff] %v852
  %1143 = vst [vmem:[%s1089] ss:$9 sm:$0xff] %v860
  %1145 = vst [vmem:[%s1092] ss:$9 sm:$0xff] %v868
  %1147 = vst [vmem:[%s1095] ss:$9 sm:$0xff] %v875
  %v1148 = vld [vmem:[#allocation1] sm:$0xff]
  %1150 = vst [vmem:[#allocation1] ss:$9 sm:$0xff] %v883
  %1152 = vst [vmem:[%s1077] ss:$9 sm:$0xff] %v891
  %1154 = vst [vmem:[%s1080] ss:$9 sm:$0xff] %v899
  %1156 = vst [vmem:[%s1083] ss:$9 sm:$0xff] %v907
  %1158 = vst [vmem:[%s1086] ss:$9 sm:$0xff] %v915
  %1160 = vst [vmem:[%s1089] ss:$9 sm:$0xff] %v923
  %1162 = vst [vmem:[%s1092] ss:$9 sm:$0xff] %v930
  %1164 = vst [vmem:[%s1095] ss:$9 sm:$0xff] %v938
  %v1165 = vld [vmem:[#allocation1] sm:$0xff]
  %1167 = vst [vmem:[#allocation1] ss:$9 sm:$0xff] %v946
  %1169 = vst [vmem:[%s1077] ss:$9 sm:$0xff] %v954
  %1171 = vst [vmem:[%s1080] ss:$9 sm:$0xff] %v962
  %1173 = vst [vmem:[%s1083] ss:$9 sm:$0xff] %v970
  %1175 = vst [vmem:[%s1086] ss:$9 sm:$0xff] %v978
  %1177 = vst [vmem:[%s1089] ss:$9 sm:$0xff] %v985
  %1179 = vst [vmem:[%s1092] ss:$9 sm:$0xff] %v993
  %1181 = vst [vmem:[%s1095] ss:$9 sm:$0xff] %v1001
  %v1182 = vld [vmem:[#allocation1] sm:$0xff]
  %1184 = vst [vmem:[#allocation1] ss:$9 sm:$0xff] %v1009
  %1186 = vst [vmem:[%s1077] ss:$9 sm:$0xff] %v1017
  %1188 = vst [vmem:[%s1080] ss:$9 sm:$0xff] %v1025
  %1190 = vst [vmem:[%s1083] ss:$9 sm:$0xff] %v1033
  %1192 = vst [vmem:[%s1086] ss:$9 sm:$0xff] %v1040
  %1194 = vst [vmem:[%s1089] ss:$9 sm:$0xff] %v1048
  %1196 = vst [vmem:[%s1092] ss:$9 sm:$0xff] %v1056
  %1198 = vst [vmem:[%s1095] ss:$9 sm:$0xff] %v1064
  %v1199 = vld [vmem:[#allocation1] sm:$0xff]
  %v1208 = vunpack.c.l.b16 %v1066
  %v1209 = vunpack.c.l.b16 %v1067
  %v1210 = vunpack.c.l.b16 %v1068
  %v1211 = vunpack.c.l.b16 %v1069
  %v1212 = vunpack.c.l.b16 %v1070
  %v1213 = vunpack.c.l.b16 %v1071
  %v1214 = vunpack.c.l.b16 %v1072
  %v1215 = vunpack.c.l.b16 %v1073
  %v1216 = vpack.c.b16 %v1209, %v1208
  %v1217 = vpack.c.b16 %v1211, %v1210
  %v1218 = vpack.c.b16 %v1213, %v1212
  %v1219 = vpack.c.b16 %v1215, %v1214
  %vm1224 = vcmask 523264
  %v1225 = vsel %vm1224, %v1097, 0
  %v1227 = vsel %vm1224, %v1114, 0
  %v1229 = vsel %vm1224, %v1131, 0
  %v1231 = vsel %vm1224, %v1148, 0
  %v1233 = vsel %vm1224, %v1165, 0
  %v1235 = vsel %vm1224, %v1182, 0
  %v1237 = vsel %vm1224, %v1199, 0
  %1239 = vmatpush.bf16.msra.mxu0 0
  %1240 = vmatpush.bf16.msra.mxu0 0
  %1241 = vmatpush.bf16.msra.mxu0 0
  %1242 = vmatpush.bf16.msra.mxu0 0
  %1243 = vmatpush.bf16.msra.mxu0 %v1219
  %1244 = vmatpush.bf16.msra.mxu0 %v1218
  %1245 = vmatpush.bf16.msra.mxu0 %v1217
  %1246 = vmatpush.bf16.msra.mxu0 %v1216
  %1247 = vmatmul.bf16.gmra.mxu0 %v1225
  %v1248 = vpop.f32.mrf.mxu0
  %v1249 = vadd.f32 0.0, %v1248
  %v1250 = vpop.f32.mrf.mxu0
  %v1251 = vadd.f32 0.0, %v1250
  %1252 = vmatmul.bf16.gmra.mxu0 %v1227
  %v1253 = vpop.f32.mrf.mxu0
  %v1254 = vadd.f32 0.0, %v1253
  %v1255 = vpop.f32.mrf.mxu0
  %v1256 = vadd.f32 0.0, %v1255
  %1257 = vmatmul.bf16.gmra.mxu0 %v1229
  %v1258 = vpop.f32.mrf.mxu0
  %v1259 = vadd.f32 0.0, %v1258
  %v1260 = vpop.f32.mrf.mxu0
  %v1261 = vadd.f32 0.0, %v1260
  %1262 = vmatmul.bf16.gmra.mxu0 %v1231
  %v1263 = vpop.f32.mrf.mxu0
  %v1264 = vadd.f32 0.0, %v1263
  %v1265 = vpop.f32.mrf.mxu0
  %v1266 = vadd.f32 0.0, %v1265
  %1267 = vmatmul.bf16.gmra.mxu0 %v1233
  %v1268 = vpop.f32.mrf.mxu0
  %v1269 = vadd.f32 0.0, %v1268
  %v1270 = vpop.f32.mrf.mxu0
  %v1271 = vadd.f32 0.0, %v1270
  %1272 = vmatmul.bf16.gmra.mxu0 %v1235
  %v1273 = vpop.f32.mrf.mxu0
  %v1274 = vadd.f32 0.0, %v1273
  %v1275 = vpop.f32.mrf.mxu0
  %v1276 = vadd.f32 0.0, %v1275
  %1277 = vmatmul.bf16.gmra.mxu0 %v1237
  %v1278 = vpop.f32.mrf.mxu0
  %v1279 = vadd.f32 0.0, %v1278
  %v1280 = vpop.f32.mrf.mxu0
  %v1281 = vadd.f32 0.0, %v1280
  %1282 = vdwg.mxu0
  %1283 = vst [vmem:[#allocation1] ss:$9 sm:$0xff] %v409
  %s1284 = scalar_lea.vmem [#allocation1], 1
  %1285 = vst [vmem:[%s1284] ss:$9 sm:$0xff] %v413
  %s1286 = scalar_lea.vmem [#allocation1], 2
  %1287 = vst [vmem:[%s1286] ss:$9 sm:$0xff] %v417
  %s1288 = scalar_lea.vmem [#allocation1], 3
  %1289 = vst [vmem:[%s1288] ss:$9 sm:$0xff] %v421
  %s1290 = scalar_lea.vmem [#allocation1], 4
  %1291 = vst [vmem:[%s1290] ss:$9 sm:$0xff] %v424
  %s1292 = scalar_lea.vmem [#allocation1], 5
  %1293 = vst [vmem:[%s1292] ss:$9 sm:$0xff] %v427
  %s1294 = scalar_lea.vmem [#allocation1], 6
  %1295 = vst [vmem:[%s1294] ss:$9 sm:$0xff] %v430
  %s1296 = scalar_lea.vmem [#allocation1], 7
  %1297 = vst [vmem:[%s1296] ss:$9 sm:$0xff] %v433
  %v1298 = vld [vmem:[#allocation1] sm:$0xff]
  %1299 = vst [vmem:[#allocation1] ss:$9 sm:$0xff] %v436
  %1300 = vst [vmem:[%s1284] ss:$9 sm:$0xff] %v439
  %1301 = vst [vmem:[%s1286] ss:$9 sm:$0xff] %v442
  %1302 = vst [vmem:[%s1288] ss:$9 sm:$0xff] %v445
  %1303 = vst [vmem:[%s1290] ss:$9 sm:$0xff] %v448
  %1304 = vst [vmem:[%s1292] ss:$9 sm:$0xff] %v451
  %1305 = vst [vmem:[%s1294] ss:$9 sm:$0xff] %v454
  %1306 = vst [vmem:[%s1296] ss:$9 sm:$0xff] %v457
  %v1307 = vld [vmem:[#allocation1] sm:$0xff]
  %1308 = vst [vmem:[#allocation1] ss:$9 sm:$0xff] %v460
  %1309 = vst [vmem:[%s1284] ss:$9 sm:$0xff] %v463
  %1310 = vst [vmem:[%s1286] ss:$9 sm:$0xff] %v466
  %1311 = vst [vmem:[%s1288] ss:$9 sm:$0xff] %v469
  %1312 = vst [vmem:[%s1290] ss:$9 sm:$0xff] %v472
  %1313 = vst [vmem:[%s1292] ss:$9 sm:$0xff] %v475
  %1314 = vst [vmem:[%s1294] ss:$9 sm:$0xff] %v478
  %1315 = vst [vmem:[%s1296] ss:$9 sm:$0xff] %v481
  %v1316 = vld [vmem:[#allocation1] sm:$0xff]
  %1317 = vst [vmem:[#allocation1] ss:$9 sm:$0xff] %v484
  %1318 = vst [vmem:[%s1284] ss:$9 sm:$0xff] %v487
  %1319 = vst [vmem:[%s1286] ss:$9 sm:$0xff] %v490
  %1320 = vst [vmem:[%s1288] ss:$9 sm:$0xff] %v493
  %1321 = vst [vmem:[%s1290] ss:$9 sm:$0xff] %v496
  %1322 = vst [vmem:[%s1292] ss:$9 sm:$0xff] %v499
  %1323 = vst [vmem:[%s1294] ss:$9 sm:$0xff] %v502
  %1324 = vst [vmem:[%s1296] ss:$9 sm:$0xff] %v505
  %v1325 = vld [vmem:[#allocation1] sm:$0xff]
  %1326 = vst [vmem:[#allocation1] ss:$9 sm:$0xff] %v508
  %1327 = vst [vmem:[%s1284] ss:$9 sm:$0xff] %v511
  %1328 = vst [vmem:[%s1286] ss:$9 sm:$0xff] %v514
  %1329 = vst [vmem:[%s1288] ss:$9 sm:$0xff] %v517
  %1330 = vst [vmem:[%s1290] ss:$9 sm:$0xff] %v520
  %1331 = vst [vmem:[%s1292] ss:$9 sm:$0xff] %v523
  %1332 = vst [vmem:[%s1294] ss:$9 sm:$0xff] %v526
  %1333 = vst [vmem:[%s1296] ss:$9 sm:$0xff] %v529
  %v1334 = vld [vmem:[#allocation1] sm:$0xff]
  %1335 = vst [vmem:[#allocation1] ss:$9 sm:$0xff] %v532
  %1336 = vst [vmem:[%s1284] ss:$9 sm:$0xff] %v535
  %1337 = vst [vmem:[%s1286] ss:$9 sm:$0xff] %v538
  %1338 = vst [vmem:[%s1288] ss:$9 sm:$0xff] %v541
  %1339 = vst [vmem:[%s1290] ss:$9 sm:$0xff] %v544
  %1340 = vst [vmem:[%s1292] ss:$9 sm:$0xff] %v547
  %1341 = vst [vmem:[%s1294] ss:$9 sm:$0xff] %v550
  %1342 = vst [vmem:[%s1296] ss:$9 sm:$0xff] %v553
  %v1343 = vld [vmem:[#allocation1] sm:$0xff]
  %1344 = vst [vmem:[#allocation1] ss:$9 sm:$0xff] %v556
  %1345 = vst [vmem:[%s1284] ss:$9 sm:$0xff] %v559
  %1346 = vst [vmem:[%s1286] ss:$9 sm:$0xff] %v562
  %1347 = vst [vmem:[%s1288] ss:$9 sm:$0xff] %v565
  %1348 = vst [vmem:[%s1290] ss:$9 sm:$0xff] %v568
  %1349 = vst [vmem:[%s1292] ss:$9 sm:$0xff] %v571
  %1350 = vst [vmem:[%s1294] ss:$9 sm:$0xff] %v574
  %1351 = vst [vmem:[%s1296] ss:$9 sm:$0xff] %v577
  %v1352 = vld [vmem:[#allocation1] sm:$0xff]
  %v1361 = vunpack.c.l.b16 %v578
  %v1362 = vunpack.c.l.b16 %v579
  %v1363 = vunpack.c.l.b16 %v580
  %v1364 = vunpack.c.l.b16 %v581
  %v1365 = vunpack.c.l.b16 %v582
  %v1366 = vunpack.c.l.b16 %v583
  %v1367 = vunpack.c.l.b16 %v584
  %v1368 = vunpack.c.l.b16 %v585
  %v1369 = vpack.c.b16 %v1362, %v1361
  %v1370 = vpack.c.b16 %v1364, %v1363
  %v1371 = vpack.c.b16 %v1366, %v1365
  %v1372 = vpack.c.b16 %v1368, %v1367
  %v1377 = vsel %vm1224, %v1298, 0
  %v1379 = vsel %vm1224, %v1307, 0
  %v1381 = vsel %vm1224, %v1316, 0
  %v1383 = vsel %vm1224, %v1325, 0
  %v1385 = vsel %vm1224, %v1334, 0
  %v1387 = vsel %vm1224, %v1343, 0
  %v1389 = vsel %vm1224, %v1352, 0
  %1391 = vmatpush.bf16.msra.mxu0 0
  %1392 = vmatpush.bf16.msra.mxu0 0
  %1393 = vmatpush.bf16.msra.mxu0 0
  %1394 = vmatpush.bf16.msra.mxu0 0
  %1395 = vmatpush.bf16.msra.mxu0 %v1372
  %1396 = vmatpush.bf16.msra.mxu0 %v1371
  %1397 = vmatpush.bf16.msra.mxu0 %v1370
  %1398 = vmatpush.bf16.msra.mxu0 %v1369
  %1399 = vmatmul.bf16.gmra.mxu0 %v1377
  %v1400 = vpop.f32.mrf.mxu0
  %v1401 = vadd.f32 %v1249, %v1400
  %v1402 = vpop.f32.mrf.mxu0
  %v1403 = vadd.f32 %v1251, %v1402
  %1404 = vmatmul.bf16.gmra.mxu0 %v1379
  %v1405 = vpop.f32.mrf.mxu0
  %v1406 = vadd.f32 %v1254, %v1405
  %v1407 = vpop.f32.mrf.mxu0
  %v1408 = vadd.f32 %v1256, %v1407
  %1409 = vmatmul.bf16.gmra.mxu0 %v1381
  %v1410 = vpop.f32.mrf.mxu0
  %v1411 = vadd.f32 %v1259, %v1410
  %v1412 = vpop.f32.mrf.mxu0
  %v1413 = vadd.f32 %v1261, %v1412
  %1414 = vmatmul.bf16.gmra.mxu0 %v1383
  %v1415 = vpop.f32.mrf.mxu0
  %v1416 = vadd.f32 %v1264, %v1415
  %v1417 = vpop.f32.mrf.mxu0
  %v1418 = vadd.f32 %v1266, %v1417
  %1419 = vmatmul.bf16.gmra.mxu0 %v1385
  %v1420 = vpop.f32.mrf.mxu0
  %v1421 = vadd.f32 %v1269, %v1420
  %v1422 = vpop.f32.mrf.mxu0
  %v1423 = vadd.f32 %v1271, %v1422
  %1424 = vmatmul.bf16.gmra.mxu0 %v1387
  %v1425 = vpop.f32.mrf.mxu0
  %v1426 = vadd.f32 %v1274, %v1425
  %v1427 = vpop.f32.mrf.mxu0
  %v1428 = vadd.f32 %v1276, %v1427
  %1429 = vmatmul.bf16.gmra.mxu0 %v1389
  %v1430 = vpop.f32.mrf.mxu0
  %v1431 = vadd.f32 %v1279, %v1430
  %v1432 = vpop.f32.mrf.mxu0
  %v1433 = vadd.f32 %v1281, %v1432
  %1434 = vdwg.mxu0
  %1435 = vst [vmem:[#allocation1] sm:$0xff] %v358
  %1436 = vst [vmem:[#allocation1 + $0x20] sm:$0xff] %v359
  %s1437 = scalar_lea.vmem [#allocation1], 1
  %v1438 = vld [vmem:[%s1437] ss:$4 sm:$0xff]
  %s1439 = scalar_lea.vmem [#allocation1], 2
  %v1440 = vld [vmem:[%s1439] ss:$4 sm:$0xff]
  %s1441 = scalar_lea.vmem [#allocation1], 3
  %v1442 = vld [vmem:[%s1441] ss:$4 sm:$0xff]
  %s1443 = scalar_lea.vmem [#allocation1], 32
  %v1444 = vld [vmem:[%s1443] ss:$4 sm:$0xff]
  %s1445 = scalar_lea.vmem [#allocation1], 33
  %v1446 = vld [vmem:[%s1445] ss:$4 sm:$0xff]
  %s1447 = scalar_lea.vmem [#allocation1], 34
  %v1448 = vld [vmem:[%s1447] ss:$4 sm:$0xff]
  %s1449 = scalar_lea.vmem [#allocation1], 35
  %v1450 = vld [vmem:[%s1449] ss:$4 sm:$0xff]
  %1451 = vst [vmem:[#allocation1] sm:$0xff] %v360
  %1452 = vst [vmem:[#allocation1 + $0x20] sm:$0xff] %v361
  %v1453 = vld [vmem:[%s1437] ss:$4 sm:$0xff]
  %v1454 = vld [vmem:[%s1439] ss:$4 sm:$0xff]
  %v1455 = vld [vmem:[%s1441] ss:$4 sm:$0xff]
  %v1456 = vld [vmem:[%s1443] ss:$4 sm:$0xff]
  %v1457 = vld [vmem:[%s1445] ss:$4 sm:$0xff]
  %v1458 = vld [vmem:[%s1447] ss:$4 sm:$0xff]
  %v1459 = vld [vmem:[%s1449] ss:$4 sm:$0xff]
  %1460 = vst [vmem:[#allocation1] sm:$0xff] %v362
  %1461 = vst [vmem:[#allocation1 + $0x20] sm:$0xff] %v363
  %v1462 = vld [vmem:[%s1437] ss:$4 sm:$0xff]
  %v1463 = vld [vmem:[%s1439] ss:$4 sm:$0xff]
  %v1464 = vld [vmem:[%s1441] ss:$4 sm:$0xff]
  %v1465 = vld [vmem:[%s1443] ss:$4 sm:$0xff]
  %v1466 = vld [vmem:[%s1445] ss:$4 sm:$0xff]
  %v1467 = vld [vmem:[%s1447] ss:$4 sm:$0xff]
  %v1468 = vld [vmem:[%s1449] ss:$4 sm:$0xff]
  %1469 = vst [vmem:[#allocation1] sm:$0xff] %v364
  %1470 = vst [vmem:[#allocation1 + $0x20] sm:$0xff] %v365
  %v1471 = vld [vmem:[%s1437] ss:$4 sm:$0xff]
  %v1472 = vld [vmem:[%s1439] ss:$4 sm:$0xff]
  %v1473 = vld [vmem:[%s1441] ss:$4 sm:$0xff]
  %v1474 = vld [vmem:[%s1443] ss:$4 sm:$0xff]
  %v1475 = vld [vmem:[%s1445] ss:$4 sm:$0xff]
  %v1476 = vld [vmem:[%s1447] ss:$4 sm:$0xff]
  %v1477 = vld [vmem:[%s1449] ss:$4 sm:$0xff]
  %1478 = vst [vmem:[#allocation1] sm:$0xff] %v366
  %1479 = vst [vmem:[#allocation1 + $0x20] sm:$0xff] %v367
  %v1480 = vld [vmem:[%s1437] ss:$4 sm:$0xff]
  %v1481 = vld [vmem:[%s1439] ss:$4 sm:$0xff]
  %v1482 = vld [vmem:[%s1441] ss:$4 sm:$0xff]
  %v1483 = vld [vmem:[%s1443] ss:$4 sm:$0xff]
  %v1484 = vld [vmem:[%s1445] ss:$4 sm:$0xff]
  %v1485 = vld [vmem:[%s1447] ss:$4 sm:$0xff]
  %v1486 = vld [vmem:[%s1449] ss:$4 sm:$0xff]
  %1487 = vst [vmem:[#allocation1] sm:$0xff] %v368
  %1488 = vst [vmem:[#allocation1 + $0x20] sm:$0xff] %v369
  %v1489 = vld [vmem:[%s1437] ss:$4 sm:$0xff]
  %v1490 = vld [vmem:[%s1439] ss:$4 sm:$0xff]
  %v1491 = vld [vmem:[%s1441] ss:$4 sm:$0xff]
  %v1492 = vld [vmem:[%s1443] ss:$4 sm:$0xff]
  %v1493 = vld [vmem:[%s1445] ss:$4 sm:$0xff]
  %v1494 = vld [vmem:[%s1447] ss:$4 sm:$0xff]
  %v1495 = vld [vmem:[%s1449] ss:$4 sm:$0xff]
  %1496 = vst [vmem:[#allocation1] sm:$0xff] %v370
  %1497 = vst [vmem:[#allocation1 + $0x20] sm:$0xff] %v371
  %v1498 = vld [vmem:[%s1437] ss:$4 sm:$0xff]
  %v1499 = vld [vmem:[%s1439] ss:$4 sm:$0xff]
  %v1500 = vld [vmem:[%s1441] ss:$4 sm:$0xff]
  %v1501 = vld [vmem:[%s1443] ss:$4 sm:$0xff]
  %v1502 = vld [vmem:[%s1445] ss:$4 sm:$0xff]
  %v1503 = vld [vmem:[%s1447] ss:$4 sm:$0xff]
  %v1504 = vld [vmem:[%s1449] ss:$4 sm:$0xff]
  %1505 = vst [vmem:[#allocation1] sm:$0xff] %v372
  %1506 = vst [vmem:[#allocation1 + $0x20] sm:$0xff] %v373
  %v1507 = vld [vmem:[%s1437] ss:$4 sm:$0xff]
  %v1508 = vld [vmem:[%s1439] ss:$4 sm:$0xff]
  %v1509 = vld [vmem:[%s1441] ss:$4 sm:$0xff]
  %v1510 = vld [vmem:[%s1443] ss:$4 sm:$0xff]
  %v1511 = vld [vmem:[%s1445] ss:$4 sm:$0xff]
  %v1512 = vld [vmem:[%s1447] ss:$4 sm:$0xff]
  %v1513 = vld [vmem:[%s1449] ss:$4 sm:$0xff]
  %s1514 = scalar_lea.vmem %s2, 64
  %v1515 = vld [vmem:[%s1514] sm:$0xf]
  %v1516 = vld [vmem:[%s1514 + $0x4] sm:$0xf]
  %v1517 = vld [vmem:[%s1514 + $0x8] sm:$0xf]
  %v1518 = vld [vmem:[%s1514 + $0xc] sm:$0xf]
  %v1519 = vld [vmem:[%s1514 + $0x10] sm:$0xf]
  %v1520 = vld [vmem:[%s1514 + $0x14] sm:$0xf]
  %v1521 = vld [vmem:[%s1514 + $0x18] sm:$0xf]
  %v1522 = vld [vmem:[%s1514 + $0x1c] sm:$0xf]
  %1523 = vst [vmem:[#allocation1] ss:$9 sm:$0xff] %v1438
  %s1524 = scalar_lea.vmem [#allocation1], 1
  %1525 = vst [vmem:[%s1524] ss:$9 sm:$0xff] %v1440
  %s1526 = scalar_lea.vmem [#allocation1], 2
  %1527 = vst [vmem:[%s1526] ss:$9 sm:$0xff] %v1442
  %s1528 = scalar_lea.vmem [#allocation1], 3
  %1529 = vst [vmem:[%s1528] ss:$9 sm:$0xff] %v1444
  %s1530 = scalar_lea.vmem [#allocation1], 4
  %1531 = vst [vmem:[%s1530] ss:$9 sm:$0xff] %v1446
  %s1532 = scalar_lea.vmem [#allocation1], 5
  %1533 = vst [vmem:[%s1532] ss:$9 sm:$0xff] %v1448
  %s1534 = scalar_lea.vmem [#allocation1], 6
  %1535 = vst [vmem:[%s1534] ss:$9 sm:$0xff] %v1450
  %s1536 = scalar_lea.vmem [#allocation1], 7
  %1537 = vst [vmem:[%s1536] ss:$9 sm:$0xff] %v1453
  %v1538 = vld [vmem:[#allocation1] sm:$0xff]
  %1539 = vst [vmem:[#allocation1] ss:$9 sm:$0xff] %v1454
  %1540 = vst [vmem:[%s1524] ss:$9 sm:$0xff] %v1455
  %1541 = vst [vmem:[%s1526] ss:$9 sm:$0xff] %v1456
  %1542 = vst [vmem:[%s1528] ss:$9 sm:$0xff] %v1457
  %1543 = vst [vmem:[%s1530] ss:$9 sm:$0xff] %v1458
  %1544 = vst [vmem:[%s1532] ss:$9 sm:$0xff] %v1459
  %1545 = vst [vmem:[%s1534] ss:$9 sm:$0xff] %v1462
  %1546 = vst [vmem:[%s1536] ss:$9 sm:$0xff] %v1463
  %v1547 = vld [vmem:[#allocation1] sm:$0xff]
  %1548 = vst [vmem:[#allocation1] ss:$9 sm:$0xff] %v1464
  %1549 = vst [vmem:[%s1524] ss:$9 sm:$0xff] %v1465
  %1550 = vst [vmem:[%s1526] ss:$9 sm:$0xff] %v1466
  %1551 = vst [vmem:[%s1528] ss:$9 sm:$0xff] %v1467
  %1552 = vst [vmem:[%s1530] ss:$9 sm:$0xff] %v1468
  %1553 = vst [vmem:[%s1532] ss:$9 sm:$0xff] %v1471
  %1554 = vst [vmem:[%s1534] ss:$9 sm:$0xff] %v1472
  %1555 = vst [vmem:[%s1536] ss:$9 sm:$0xff] %v1473
  %v1556 = vld [vmem:[#allocation1] sm:$0xff]
  %1557 = vst [vmem:[#allocation1] ss:$9 sm:$0xff] %v1474
  %1558 = vst [vmem:[%s1524] ss:$9 sm:$0xff] %v1475
  %1559 = vst [vmem:[%s1526] ss:$9 sm:$0xff] %v1476
  %1560 = vst [vmem:[%s1528] ss:$9 sm:$0xff] %v1477
  %1561 = vst [vmem:[%s1530] ss:$9 sm:$0xff] %v1480
  %1562 = vst [vmem:[%s1532] ss:$9 sm:$0xff] %v1481
  %1563 = vst [vmem:[%s1534] ss:$9 sm:$0xff] %v1482
  %1564 = vst [vmem:[%s1536] ss:$9 sm:$0xff] %v1483
  %v1565 = vld [vmem:[#allocation1] sm:$0xff]
  %1566 = vst [vmem:[#allocation1] ss:$9 sm:$0xff] %v1484
  %1567 = vst [vmem:[%s1524] ss:$9 sm:$0xff] %v1485
  %1568 = vst [vmem:[%s1526] ss:$9 sm:$0xff] %v1486
  %1569 = vst [vmem:[%s1528] ss:$9 sm:$0xff] %v1489
  %1570 = vst [vmem:[%s1530] ss:$9 sm:$0xff] %v1490
  %1571 = vst [vmem:[%s1532] ss:$9 sm:$0xff] %v1491
  %1572 = vst [vmem:[%s1534] ss:$9 sm:$0xff] %v1492
  %1573 = vst [vmem:[%s1536] ss:$9 sm:$0xff] %v1493
  %v1574 = vld [vmem:[#allocation1] sm:$0xff]
  %1575 = vst [vmem:[#allocation1] ss:$9 sm:$0xff] %v1494
  %1576 = vst [vmem:[%s1524] ss:$9 sm:$0xff] %v1495
  %1577 = vst [vmem:[%s1526] ss:$9 sm:$0xff] %v1498
  %1578 = vst [vmem:[%s1528] ss:$9 sm:$0xff] %v1499
  %1579 = vst [vmem:[%s1530] ss:$9 sm:$0xff] %v1500
  %1580 = vst [vmem:[%s1532] ss:$9 sm:$0xff] %v1501
  %1581 = vst [vmem:[%s1534] ss:$9 sm:$0xff] %v1502
  %1582 = vst [vmem:[%s1536] ss:$9 sm:$0xff] %v1503
  %v1583 = vld [vmem:[#allocation1] sm:$0xff]
  %1584 = vst [vmem:[#allocation1] ss:$9 sm:$0xff] %v1504
  %1585 = vst [vmem:[%s1524] ss:$9 sm:$0xff] %v1507
  %1586 = vst [vmem:[%s1526] ss:$9 sm:$0xff] %v1508
  %1587 = vst [vmem:[%s1528] ss:$9 sm:$0xff] %v1509
  %1588 = vst [vmem:[%s1530] ss:$9 sm:$0xff] %v1510
  %1589 = vst [vmem:[%s1532] ss:$9 sm:$0xff] %v1511
  %1590 = vst [vmem:[%s1534] ss:$9 sm:$0xff] %v1512
  %1591 = vst [vmem:[%s1536] ss:$9 sm:$0xff] %v1513
  %v1592 = vld [vmem:[#allocation1] sm:$0xff]
  %v1601 = vunpack.c.l.b16 %v1515
  %v1602 = vunpack.c.l.b16 %v1516
  %v1603 = vunpack.c.l.b16 %v1517
  %v1604 = vunpack.c.l.b16 %v1518
  %v1605 = vunpack.c.l.b16 %v1519
  %v1606 = vunpack.c.l.b16 %v1520
  %v1607 = vunpack.c.l.b16 %v1521
  %v1608 = vunpack.c.l.b16 %v1522
  %v1609 = vpack.c.b16 %v1602, %v1601
  %v1610 = vpack.c.b16 %v1604, %v1603
  %v1611 = vpack.c.b16 %v1606, %v1605
  %v1612 = vpack.c.b16 %v1608, %v1607
  %v1617 = vsel %vm1224, %v1538, 0
  %v1619 = vsel %vm1224, %v1547, 0
  %v1621 = vsel %vm1224, %v1556, 0
  %v1623 = vsel %vm1224, %v1565, 0
  %v1625 = vsel %vm1224, %v1574, 0
  %v1627 = vsel %vm1224, %v1583, 0
  %v1629 = vsel %vm1224, %v1592, 0
  %1631 = vmatpush.bf16.msra.mxu0 0
  %1632 = vmatpush.bf16.msra.mxu0 0
  %1633 = vmatpush.bf16.msra.mxu0 0
  %1634 = vmatpush.bf16.msra.mxu0 0
  %1635 = vmatpush.bf16.msra.mxu0 %v1612
  %1636 = vmatpush.bf16.msra.mxu0 %v1611
  %1637 = vmatpush.bf16.msra.mxu0 %v1610
  %1638 = vmatpush.bf16.msra.mxu0 %v1609
  %1639 = vmatmul.bf16.gmra.mxu0 %v1617
  %v1640 = vpop.f32.mrf.mxu0
  %v1641 = vadd.f32 0.0, %v1640
  %v1642 = vpop.f32.mrf.mxu0
  %v1643 = vadd.f32 0.0, %v1642
  %1644 = vmatmul.bf16.gmra.mxu0 %v1619
  %v1645 = vpop.f32.mrf.mxu0
  %v1646 = vadd.f32 0.0, %v1645
  %v1647 = vpop.f32.mrf.mxu0
  %v1648 = vadd.f32 0.0, %v1647
  %1649 = vmatmul.bf16.gmra.mxu0 %v1621
  %v1650 = vpop.f32.mrf.mxu0
  %v1651 = vadd.f32 0.0, %v1650
  %v1652 = vpop.f32.mrf.mxu0
  %v1653 = vadd.f32 0.0, %v1652
  %1654 = vmatmul.bf16.gmra.mxu0 %v1623
  %v1655 = vpop.f32.mrf.mxu0
  %v1656 = vadd.f32 0.0, %v1655
  %v1657 = vpop.f32.mrf.mxu0
  %v1658 = vadd.f32 0.0, %v1657
  %1659 = vmatmul.bf16.gmra.mxu0 %v1625
  %v1660 = vpop.f32.mrf.mxu0
  %v1661 = vadd.f32 0.0, %v1660
  %v1662 = vpop.f32.mrf.mxu0
  %v1663 = vadd.f32 0.0, %v1662
  %1664 = vmatmul.bf16.gmra.mxu0 %v1627
  %v1665 = vpop.f32.mrf.mxu0
  %v1666 = vadd.f32 0.0, %v1665
  %v1667 = vpop.f32.mrf.mxu0
  %v1668 = vadd.f32 0.0, %v1667
  %1669 = vmatmul.bf16.gmra.mxu0 %v1629
  %v1670 = vpop.f32.mrf.mxu0
  %v1671 = vadd.f32 0.0, %v1670
  %v1672 = vpop.f32.mrf.mxu0
  %v1673 = vadd.f32 0.0, %v1672
  %1674 = vdwg.mxu0
  %v1675 = vadd.f32 %v1401, %v1641
  %v1676 = vadd.f32 %v1403, %v1643
  %v1677 = vadd.f32 %v1406, %v1646
  %v1678 = vadd.f32 %v1408, %v1648
  %v1679 = vadd.f32 %v1411, %v1651
  %v1680 = vadd.f32 %v1413, %v1653
  %v1681 = vadd.f32 %v1416, %v1656
  %v1682 = vadd.f32 %v1418, %v1658
  %v1683 = vadd.f32 %v1421, %v1661
  %v1684 = vadd.f32 %v1423, %v1663
  %v1685 = vadd.f32 %v1426, %v1666
  %v1686 = vadd.f32 %v1428, %v1668
  %v1687 = vadd.f32 %v1431, %v1671
  %v1688 = vadd.f32 %v1433, %v1673
  %v1703 = vrot.slane %v1675, 2
  %v1704 = vrot.slane %v1675, 4
  %v1705 = vrot.slane %v1675, 6
  %v1706 = vrot.slane %v1676, 2
  %v1707 = vrot.slane %v1676, 4
  %v1708 = vrot.slane %v1676, 6
  %v1709 = vrot.slane %v1677, 2
  %v1710 = vrot.slane %v1677, 4
  %v1711 = vrot.slane %v1677, 6
  %v1712 = vrot.slane %v1678, 2
  %v1713 = vrot.slane %v1678, 4
  %v1714 = vrot.slane %v1678, 6
  %v1715 = vrot.slane %v1679, 2
  %v1716 = vrot.slane %v1679, 4
  %v1717 = vrot.slane %v1679, 6
  %v1718 = vrot.slane %v1680, 2
  %v1719 = vrot.slane %v1680, 4
  %v1720 = vrot.slane %v1680, 6
  %v1721 = vrot.slane %v1681, 2
  %v1722 = vrot.slane %v1681, 4
  %v1723 = vrot.slane %v1681, 6
  %v1724 = vrot.slane %v1682, 2
  %v1725 = vrot.slane %v1682, 4
  %v1726 = vrot.slane %v1682, 6
  %v1727 = vrot.slane %v1683, 2
  %v1728 = vrot.slane %v1683, 4
  %v1729 = vrot.slane %v1683, 6
  %v1730 = vrot.slane %v1684, 2
  %v1731 = vrot.slane %v1684, 4
  %v1732 = vrot.slane %v1684, 6
  %v1733 = vrot.slane %v1685, 2
  %v1734 = vrot.slane %v1685, 4
  %v1735 = vrot.slane %v1685, 6
  %v1736 = vrot.slane %v1686, 2
  %v1737 = vrot.slane %v1686, 4
  %v1738 = vrot.slane %v1686, 6
  %v1739 = vrot.slane %v1687, 2
  %v1740 = vrot.slane %v1687, 4
  %v1741 = vrot.slane %v1687, 6
  %v1742 = vrot.slane %v1688, 2
  %v1743 = vrot.slane %v1688, 4
  %v1744 = vrot.slane %v1688, 6
  %1745 = vst [vmem:[#allocation1] ss:$4 sm:$0xff] %v1675
  %s1746 = scalar_lea.vmem [#allocation1], 1
  %1747 = vst [vmem:[%s1746] ss:$4 sm:$0xff] %v1703
  %s1748 = scalar_lea.vmem [#allocation1], 2
  %1749 = vst [vmem:[%s1748] ss:$4 sm:$0xff] %v1704
  %s1750 = scalar_lea.vmem [#allocation1], 3
  %1751 = vst [vmem:[%s1750] ss:$4 sm:$0xff] %v1705
  %s1752 = scalar_lea.vmem [#allocation1], 32
  %1753 = vst [vmem:[%s1752] ss:$4 sm:$0xff] %v1676
  %s1754 = scalar_lea.vmem [#allocation1], 33
  %1755 = vst [vmem:[%s1754] ss:$4 sm:$0xff] %v1706
  %s1756 = scalar_lea.vmem [#allocation1], 34
  %1757 = vst [vmem:[%s1756] ss:$4 sm:$0xff] %v1707
  %v1758 = vld.sshfl [vmem:[#allocation1] sm:$0xff pattern:$0x73625140]
  %v1759 = vld.sshfl [vmem:[#allocation1 + $0x20] sm:$0xff pattern:$0x73625140]
  %1760 = vst [vmem:[#allocation1] ss:$4 sm:$0xff] %v1708
  %1761 = vst [vmem:[%s1746] ss:$4 sm:$0xff] %v1677
  %1762 = vst [vmem:[%s1748] ss:$4 sm:$0xff] %v1709
  %1763 = vst [vmem:[%s1750] ss:$4 sm:$0xff] %v1710
  %1764 = vst [vmem:[%s1752] ss:$4 sm:$0xff] %v1711
  %1765 = vst [vmem:[%s1754] ss:$4 sm:$0xff] %v1678
  %1766 = vst [vmem:[%s1756] ss:$4 sm:$0xff] %v1712
  %v1767 = vld.sshfl [vmem:[#allocation1] sm:$0xff pattern:$0x73625140]
  %v1768 = vld.sshfl [vmem:[#allocation1 + $0x20] sm:$0xff pattern:$0x73625140]
  %1769 = vst [vmem:[#allocation1] ss:$4 sm:$0xff] %v1713
  %1770 = vst [vmem:[%s1746] ss:$4 sm:$0xff] %v1714
  %1771 = vst [vmem:[%s1748] ss:$4 sm:$0xff] %v1679
  %1772 = vst [vmem:[%s1750] ss:$4 sm:$0xff] %v1715
  %1773 = vst [vmem:[%s1752] ss:$4 sm:$0xff] %v1716
  %1774 = vst [vmem:[%s1754] ss:$4 sm:$0xff] %v1717
  %1775 = vst [vmem:[%s1756] ss:$4 sm:$0xff] %v1680
  %v1776 = vld.sshfl [vmem:[#allocation1] sm:$0xff pattern:$0x73625140]
  %v1777 = vld.sshfl [vmem:[#allocation1 + $0x20] sm:$0xff pattern:$0x73625140]
  %1778 = vst [vmem:[#allocation1] ss:$4 sm:$0xff] %v1718
  %1779 = vst [vmem:[%s1746] ss:$4 sm:$0xff] %v1719
  %1780 = vst [vmem:[%s1748] ss:$4 sm:$0xff] %v1720
  %1781 = vst [vmem:[%s1750] ss:$4 sm:$0xff] %v1681
  %1782 = vst [vmem:[%s1752] ss:$4 sm:$0xff] %v1721
  %1783 = vst [vmem:[%s1754] ss:$4 sm:$0xff] %v1722
  %1784 = vst [vmem:[%s1756] ss:$4 sm:$0xff] %v1723
  %v1785 = vld.sshfl [vmem:[#allocation1] sm:$0xff pattern:$0x73625140]
  %v1786 = vld.sshfl [vmem:[#allocation1 + $0x20] sm:$0xff pattern:$0x73625140]
  %1787 = vst [vmem:[#allocation1] ss:$4 sm:$0xff] %v1682
  %1788 = vst [vmem:[%s1746] ss:$4 sm:$0xff] %v1724
  %1789 = vst [vmem:[%s1748] ss:$4 sm:$0xff] %v1725
  %1790 = vst [vmem:[%s1750] ss:$4 sm:$0xff] %v1726
  %1791 = vst [vmem:[%s1752] ss:$4 sm:$0xff] %v1683
  %1792 = vst [vmem:[%s1754] ss:$4 sm:$0xff] %v1727
  %1793 = vst [vmem:[%s1756] ss:$4 sm:$0xff] %v1728
  %v1794 = vld.sshfl [vmem:[#allocation1] sm:$0xff pattern:$0x73625140]
  %v1795 = vld.sshfl [vmem:[#allocation1 + $0x20] sm:$0xff pattern:$0x73625140]
  %1796 = vst [vmem:[#allocation1] ss:$4 sm:$0xff] %v1729
  %1797 = vst [vmem:[%s1746] ss:$4 sm:$0xff] %v1684
  %1798 = vst [vmem:[%s1748] ss:$4 sm:$0xff] %v1730
  %1799 = vst [vmem:[%s1750] ss:$4 sm:$0xff] %v1731
  %1800 = vst [vmem:[%s1752] ss:$4 sm:$0xff] %v1732
  %1801 = vst [vmem:[%s1754] ss:$4 sm:$0xff] %v1685
  %1802 = vst [vmem:[%s1756] ss:$4 sm:$0xff] %v1733
  %v1803 = vld.sshfl [vmem:[#allocation1] sm:$0xff pattern:$0x73625140]
  %v1804 = vld.sshfl [vmem:[#allocation1 + $0x20] sm:$0xff pattern:$0x73625140]
  %1805 = vst [vmem:[#allocation1] ss:$4 sm:$0xff] %v1734
  %1806 = vst [vmem:[%s1746] ss:$4 sm:$0xff] %v1735
  %1807 = vst [vmem:[%s1748] ss:$4 sm:$0xff] %v1686
  %1808 = vst [vmem:[%s1750] ss:$4 sm:$0xff] %v1736
  %1809 = vst [vmem:[%s1752] ss:$4 sm:$0xff] %v1737
  %1810 = vst [vmem:[%s1754] ss:$4 sm:$0xff] %v1738
  %1811 = vst [vmem:[%s1756] ss:$4 sm:$0xff] %v1687
  %v1812 = vld.sshfl [vmem:[#allocation1] sm:$0xff pattern:$0x73625140]
  %v1813 = vld.sshfl [vmem:[#allocation1 + $0x20] sm:$0xff pattern:$0x73625140]
  %1814 = vst [vmem:[#allocation1] ss:$4 sm:$0xff] %v1739
  %1815 = vst [vmem:[%s1746] ss:$4 sm:$0xff] %v1740
  %1816 = vst [vmem:[%s1748] ss:$4 sm:$0xff] %v1741
  %1817 = vst [vmem:[%s1750] ss:$4 sm:$0xff] %v1688
  %1818 = vst [vmem:[%s1752] ss:$4 sm:$0xff] %v1742
  %1819 = vst [vmem:[%s1754] ss:$4 sm:$0xff] %v1743
  %1820 = vst [vmem:[%s1756] ss:$4 sm:$0xff] %v1744
  %v1821 = vld.sshfl [vmem:[#allocation1] sm:$0xff pattern:$0x73625140]
  %v1822 = vld.sshfl [vmem:[#allocation1 + $0x20] sm:$0xff pattern:$0x73625140]
  %vm1839 = vcmask 1045504
  %v1840 = vsel %vm1839, %v1759, -inf
  %v1841 = vmax.f32 %v1758, %v1840
  %v1842 = vrot.slane %v1841, 4
  %v1843 = vmax.f32 %v1841, %v1842
  %v1844 = vrot.slane %v1843, 2
  %v1845 = vmax.f32 %v1843, %v1844
  %v1846 = vrot.slane %v1845, 1
  %v1847 = vmax.f32 %v1845, %v1846
  %v1848 = vsel %vm1839, %v1768, -inf
  %v1849 = vmax.f32 %v1767, %v1848
  %v1850 = vrot.slane %v1849, 4
  %v1851 = vmax.f32 %v1849, %v1850
  %v1852 = vrot.slane %v1851, 2
  %v1853 = vmax.f32 %v1851, %v1852
  %v1854 = vrot.slane %v1853, 1
  %v1855 = vmax.f32 %v1853, %v1854
  %v1856 = vsel %vm1839, %v1777, -inf
  %v1857 = vmax.f32 %v1776, %v1856
  %v1858 = vrot.slane %v1857, 4
  %v1859 = vmax.f32 %v1857, %v1858
  %v1860 = vrot.slane %v1859, 2
  %v1861 = vmax.f32 %v1859, %v1860
  %v1862 = vrot.slane %v1861, 1
  %v1863 = vmax.f32 %v1861, %v1862
  %v1864 = vsel %vm1839, %v1786, -inf
  %v1865 = vmax.f32 %v1785, %v1864
  %v1866 = vrot.slane %v1865, 4
  %v1867 = vmax.f32 %v1865, %v1866
  %v1868 = vrot.slane %v1867, 2
  %v1869 = vmax.f32 %v1867, %v1868
  %v1870 = vrot.slane %v1869, 1
  %v1871 = vmax.f32 %v1869, %v1870
  %v1872 = vsel %vm1839, %v1795, -inf
  %v1873 = vmax.f32 %v1794, %v1872
  %v1874 = vrot.slane %v1873, 4
  %v1875 = vmax.f32 %v1873, %v1874
  %v1876 = vrot.slane %v1875, 2
  %v1877 = vmax.f32 %v1875, %v1876
  %v1878 = vrot.slane %v1877, 1
  %v1879 = vmax.f32 %v1877, %v1878
  %v1880 = vsel %vm1839, %v1804, -inf
  %v1881 = vmax.f32 %v1803, %v1880
  %v1882 = vrot.slane %v1881, 4
  %v1883 = vmax.f32 %v1881, %v1882
  %v1884 = vrot.slane %v1883, 2
  %v1885 = vmax.f32 %v1883, %v1884
  %v1886 = vrot.slane %v1885, 1
  %v1887 = vmax.f32 %v1885, %v1886
  %v1888 = vsel %vm1839, %v1813, -inf
  %v1889 = vmax.f32 %v1812, %v1888
  %v1890 = vrot.slane %v1889, 4
  %v1891 = vmax.f32 %v1889, %v1890
  %v1892 = vrot.slane %v1891, 2
  %v1893 = vmax.f32 %v1891, %v1892
  %v1894 = vrot.slane %v1893, 1
  %v1895 = vmax.f32 %v1893, %v1894
  %v1896 = vsel %vm1839, %v1822, -inf
  %v1897 = vmax.f32 %v1821, %v1896
  %v1898 = vrot.slane %v1897, 4
  %v1899 = vmax.f32 %v1897, %v1898
  %v1900 = vrot.slane %v1899, 2
  %v1901 = vmax.f32 %v1899, %v1900
  %v1902 = vrot.slane %v1901, 1
  %v1903 = vmax.f32 %v1901, %v1902
  %v1904 = vld [vmem:[%s3] sm:$0x1]
  %v1906 = vperm.slane %v1904, 0
  %v1908 = vadd.f32 %v1847, %v1906
  %v1909 = vadd.f32 %v1855, %v1906
  %v1910 = vadd.f32 %v1863, %v1906
  %v1911 = vadd.f32 %v1871, %v1906
  %v1912 = vadd.f32 %v1879, %v1906
  %v1913 = vadd.f32 %v1887, %v1906
  %v1914 = vadd.f32 %v1895, %v1906
  %v1915 = vadd.f32 %v1903, %v1906
  %v1916 = vmax.f32 %v1908, 0.0
  %v1917 = vmax.f32 %v1909, 0.0
  %v1918 = vmax.f32 %v1910, 0.0
  %v1919 = vmax.f32 %v1911, 0.0
  %v1920 = vmax.f32 %v1912, 0.0
  %v1921 = vmax.f32 %v1913, 0.0
  %v1922 = vmax.f32 %v1914, 0.0
  %v1923 = vmax.f32 %v1915, 0.0
  %v1924 = vld [vmem:[%s4] sm:$0x1]
  %v1926 = vperm.slane %v1924, 0
  %v1928 = vmul.f32 %v1916, %v1926
  %v1929 = vmul.f32 %v1917, %v1926
  %v1930 = vmul.f32 %v1918, %v1926
  %v1931 = vmul.f32 %v1919, %v1926
  %v1932 = vmul.f32 %v1920, %v1926
  %v1933 = vmul.f32 %v1921, %v1926
  %v1934 = vmul.f32 %v1922, %v1926
  %v1935 = vmul.f32 %v1923, %v1926
  %v1944 = vrot.slane %v1929, 7
  %v1945 = vsel %vm410, %v1944, %v1928
  %v1946 = vrot.slane %v1930, 6
  %v1947 = vsel %vm414, %v1946, %v1945
  %v1948 = vrot.slane %v1931, 5
  %v1949 = vsel %vm418, %v1948, %v1947
  %v1950 = vrot.slane %v1932, 4
  %vm1951 = vcmask 1044484
  %v1952 = vsel %vm1951, %v1950, %v1949
  %v1953 = vrot.slane %v1933, 3
  %vm1954 = vcmask 1045509
  %v1955 = vsel %vm1954, %v1953, %v1952
  %v1956 = vrot.slane %v1934, 2
  %vm1957 = vcmask 1046534
  %v1958 = vsel %vm1957, %v1956, %v1955
  %v1959 = vrot.slane %v1935, 1
  %vm1960 = vcmask 1047559
  %v1961 = vsel %vm1960, %v1959, %v1958
  %1963 = vadd.xlane.f32.xlu0 %v1961
  %v1964 = vpop.xlane.xlu0 %1963
  %v1965 = vld [vmem:[#allocation2] sm:$0x1]
  %v1967 = vperm.slane %v1965, 0
  %v1969 = vadd.f32 %v1964, %v1967
  %vm1970 = vcmask 7168
  %1971 = vst.msk [vmem:[%s6] sm:$0xff] %vm1970, %v1969
  // Predicated region
  $region26: #{_forward_impl.1} parent=0 // pred_check
    _
  $region27: #{_forward_impl.1} parent=0 // pred_check_branch
    %1973 = sbr.rel (0) target = $region29
  $region28: #{_forward_impl.1} parent=0 // pred_region
    _
  $region29: #{_forward_impl.1} parent=0 // pred_fallthru
    _
  // Predicated region
  $region30: #{_forward_impl.1} parent=0 // pred_check
    _
  $region31: #{_forward_impl.1} parent=0 // pred_check_branch
    %1975 = sbr.rel (0) target = $region33
  $region32: #{_forward_impl.1} parent=0 // pred_region
    _
  $region33: #{_forward_impl.1} parent=0 // pred_fallthru
    _

</llo_original>
